<compile_context>
chip_gen: v7x
topology: tpu7x:2x2x1
jax: 0.10.0
libtpu: 0.0.40
codegen_flags: <defaults>
</compile_context>

<pallas_src>
import math
import functools

import numpy as np
import jax
import jax.numpy as jnp
from jax import lax
from jax.experimental import pallas as pl
from jax.experimental.pallas import tpu as pltpu


def _round_up(n: int, m: int) -> int:
    return ((n + m - 1) // m) * m


def _angle_tables(nb_radiuses: int):
    """Torch branch logic -- used only by the pure-JAX reference."""
    a_eff, use_neg = [], []
    for i in range(nb_radiuses):
        a = i * (2.0 * math.pi / nb_radiuses) - math.pi
        if a > 0.5 * math.pi:
            a_eff.append(a - math.pi)
            use_neg.append(1.0)
        elif a < -0.5 * math.pi:
            a_eff.append(a + math.pi)
            use_neg.append(1.0)
        else:
            a_eff.append(a)
            use_neg.append(0.0)
    return (np.asarray(a_eff, np.float32), np.asarray(use_neg, np.float32))


def _radius_kernel(ang_ref, px_ref, py_ref, cr_ref, ci_ref, x_ref, out_ref, *,
                   moments, sigma, rc):
    """One grid step = TS slices; radii processed `rc` at a time.

    ang_ref : VMEM f32[nr, 1]   angles i*(2pi/nr) - pi    (constant block)
    px_ref  : VMEM f32[1, P]    real coord of each flattened pixel (col)
    py_ref  : VMEM f32[1, P]    imag coord of each flattened pixel (row)
    cr_ref  : VMEM f32[TS, 1]   center-of-mass real part per slice
    ci_ref  : VMEM f32[TS, 1]   center-of-mass imag part per slice
    x_ref   : VMEM f32[TS, P]   image slices (lane-dense)
    out_ref : VMEM f32[nm, TS, nr]
    """
    nr = ang_ref.shape[0]
    two_pi = 2.0 * math.pi
    inv_two_pi = 1.0 / two_pi
    neg_inv_2s2 = -1.0 / (2.0 * sigma * sigma)
    coef = 1.0 / (sigma * math.sqrt(two_pi))

    x = x_ref[...]                                    # (TS, P)
    dx = px_ref[...] - cr_ref[...]                    # (TS, P) real(centered)
    dy = py_ref[...] - ci_ref[...]                    # (TS, P) imag(centered)
    theta = jnp.arctan2(dy, dx)                       # one arctan2 per pixel
    r2 = dx * dx + dy * dy                            # |centered|^2

    # Per-moment pixel weights x * |centered|^m (integer powers only, VPU);
    # kept as separate arrays (no stack relayouts), hoisted out of the chunk
    # loop so theta/r2/weights are computed once per slice block.
    need_abs = any(int(m) % 2 == 1 for m in moments)
    abs_c = jnp.sqrt(r2) if need_abs else None
    weights3 = []
    for m in moments:
        m = int(m)
        if m == 0:
            w = x
        elif m % 2 == 0:
            w = x * (r2 ** (m // 2))
        else:
            w = x * (abs_c ** m)
        weights3.append(w[:, None, :])                # (TS, 1, P)

    theta3 = theta[:, None, :]                        # (TS, 1, P)

    # Radius chunks: rc radii at a time bounds the (TS, rc, P) temporaries
    # to the VMEM budget (rc is a static divisor of nr chosen host-side).
    for c in range(nr // rc):
        r0 = c * rc
        ang = ang_ref[r0:r0 + rc, :][None, :, :]      # (1, rc, 1), static slice
        d = theta3 - ang                              # (TS, rc, P)
        # Wrap to [-pi, pi] in one fused pass; equivalent to torch's +-pi
        # branch selection wherever the Gaussian is non-negligible (they can
        # only differ where exp(-(pi/2)^2 / (2 sigma^2)) ~ e^-123 for sigma=0.1).
        d = d - two_pi * jnp.floor(d * inv_two_pi + 0.5)
        # Unnormalised Gaussian; the 1/(sigma*sqrt(2pi)) factor is folded into
        # the tiny (TS, rc) result instead of a (TS, rc, P) multiply.
        filt = jnp.exp((d * d) * neg_inv_2s2)         # (TS, rc, P)

        for j, m in enumerate(moments):
            m = int(m)
            # VPU multiply + lane reduce: no per-slice MXU weight reloads.
            s = jnp.sum(weights3[j] * filt, axis=-1)  # (TS, rc)
            val = ((m + 2.0) * coef) * s
            e = m + 2
            if e & (e - 1) == 0:
                # (m+2) power of two -> repeated sqrt (cheaper, NaN for val<0
                # just like torch's fractional pow of a negative base).
                root = val
                while e > 1:
                    root = jnp.sqrt(root)
                    e //= 2
            else:
                root = jnp.exp(jnp.log(val) * (1.0 / (m + 2.0)))
            out_ref[j, :, r0:r0 + rc] = root          # static lane-range store


def _step_vmem_bytes(ts, rc, P, nm):
    """Rough per-grid-step VMEM footprint (bytes) used for tile sizing."""
    fixed = 4 * (2 * ts * P)          # x block, double buffered
    fixed += 4 * (2 * 2 * P)          # px / py constant blocks
    fixed += 4 * ts * P * (5 + nm)    # dx, dy, theta, r2, |c|, moment weights
    chunk = 4 * ts * rc * P * 3       # diff, filt, product (worst case live)
    return fixed + chunk


def moment_gaussian_radius_extractor(x, center_of_mass, *, moments=(0,),
                                     nb_radiuses=24, sigma=0.1):
    """x: f32 (nb, nf, nx, ny, nz); center_of_mass: complex64 (nb, nf, nz).
    Returns f32 (len(moments), nb, nf, nb_radiuses, nz)."""
    nb, nf, nx, ny, nz = x.shape
    S = nb * nf * nz
    P = nx * ny
    nm = len(moments)
    nr = int(nb_radiuses)

    # Static tables, passed as kernel inputs with constant index_maps (their
    # block index never changes, so the pipeline does not re-fetch them).
    angles = np.asarray(
        [i * (2.0 * math.pi / nr) - math.pi for i in range(nr)],
        dtype=np.float32).reshape(nr, 1)
    idx = np.arange(P)
    px = (idx % ny).astype(np.float32).reshape(1, P)   # torch: real = idx % ny
    py = (idx // ny).astype(np.float32).reshape(1, P)  # torch: imag = idx // ny

    # Slice-major, lane-dense layout (S, P).  One XLA transpose of x; the
    # kernel is strongly compute bound (nr Gaussians per pixel) so this single
    # extra HBM round trip is minor.
    xs = jnp.transpose(x, (0, 1, 4, 2, 3)).reshape(S, P).astype(jnp.float32)
    com_r = jnp.real(center_of_mass).reshape(S, 1).astype(jnp.float32)
    com_i = jnp.imag(center_of_mass).reshape(S, 1).astype(jnp.float32)

    # Only pad when S is not already a multiple of 8 (sublane alignment);
    # ragged final blocks along S are otherwise handled by Pallas masking.
    S8 = _round_up(S, 8)
    if S8 != S:
        pad = S8 - S
        xs = jnp.pad(xs, ((0, pad), (0, 0)))
        com_r = jnp.pad(com_r, ((0, pad), (0, 0)))
        com_i = jnp.pad(com_i, ((0, pad), (0, 0)))

    # ---- tile sizing -------------------------------------------------------
    budget = 24 * 1024 * 1024          # conservative; fits every generation
    divs = [d for d in range(1, nr + 1) if nr % d == 0]
    rc_floor = max(d for d in divs if d <= 8)

    TS = min(64, S8)
    # Shrink TS until a minimal radius chunk fits the budget.
    while TS > 8 and _step_vmem_bytes(TS, rc_floor, P, nm) > budget:
        TS -= 8
    # Prefer >= 2 grid steps so ("parallel",) shards across both v7x cores.
    while TS > 8 and pl.cdiv(S8, TS) < 2:
        TS -= 8

    # rc: largest divisor of nr that fits; prefer multiples of 8 (full
    # sublane occupancy of the (TS, rc, P) chunk tensors).
    cands = (sorted([d for d in divs if d % 8 == 0], reverse=True)
             + sorted([d for d in divs if d % 8 != 0], reverse=True))
    rc = rc_floor
    for d in cands:
        if _step_vmem_bytes(TS, d, P, nm) <= budget:
            rc = d
            break
    assert nr % rc == 0

    kernel = functools.partial(
        _radius_kernel,
        moments=tuple(int(m) for m in moments),
        sigma=float(sigma),
        rc=int(rc))

    out = pl.pallas_call(
        kernel,
        out_shape=jax.ShapeDtypeStruct((nm, S8, nr), jnp.float32),
        grid_spec=pltpu.PrefetchScalarGridSpec(
            num_scalar_prefetch=0,
            grid=(pl.cdiv(S8, TS),),
            in_specs=[
                pl.BlockSpec((nr, 1), lambda s: (0, 0)),   # angles
                pl.BlockSpec((1, P), lambda s: (0, 0)),    # pixel real coords
                pl.BlockSpec((1, P), lambda s: (0, 0)),    # pixel imag coords
                pl.BlockSpec((TS, 1), lambda s: (s, 0)),   # com real
                pl.BlockSpec((TS, 1), lambda s: (s, 0)),   # com imag
                pl.BlockSpec((TS, P), lambda s: (s, 0)),   # x slices
            ],
            out_specs=pl.BlockSpec((nm, TS, nr), lambda s: (0, s, 0)),
        ),
        compiler_params=pltpu.CompilerParams(
            dimension_semantics=("parallel",),
            vmem_limit_bytes=48 * 1024 * 1024),
    )(jnp.asarray(angles), jnp.asarray(px), jnp.asarray(py), com_r, com_i, xs)

    # (nm, S, nr) -> (nm, nb, nf, nz, nr) -> (nm, nb, nf, nr, nz)
    out = out[:, :S, :].reshape(nm, nb, nf, nz, nr)
    return jnp.transpose(out, (0, 1, 2, 4, 3))


def _reference(x, center_of_mass, moments, nb_radiuses, sigma):
    """Pure-JAX reference mirroring the torch code (two-arctan branch logic)."""
    nb, nf, nx, ny, nz = x.shape
    a_eff, use_neg = _angle_tables(nb_radiuses)

    rows = jnp.arange(nx, dtype=jnp.float32)[:, None] + jnp.zeros((1, ny), jnp.float32)
    cols = jnp.zeros((nx, 1), jnp.float32) + jnp.arange(ny, dtype=jnp.float32)[None, :]

    cr = jnp.real(center_of_mass)[:, :, None, None, :]   # (nb, nf, 1, 1, nz)
    ci = jnp.imag(center_of_mass)[:, :, None, None, :]
    dx = cols[None, None, :, :, None] - cr
    dy = rows[None, None, :, :, None] - ci
    theta = jnp.arctan2(dy, dx)
    theta_neg = jnp.arctan2(-dy, -dx)
    abs_c = jnp.sqrt(dx * dx + dy * dy)
    coef = 1.0 / (sigma * math.sqrt(2.0 * math.pi))

    per_moment = []
    for m in moments:
        per_angle = []
        for r in range(nb_radiuses):
            th = theta_neg if use_neg[r] else theta
            filt = coef * jnp.exp(-((th - a_eff[r]) ** 2) / (2.0 * sigma * sigma))
            val = ((m + 2.0) * jnp.sum(filt * x * abs_c ** m, axis=(2, 3))
                   ) ** (1.0 / (m + 2.0))                 # (nb, nf, nz)
            per_angle.append(val)
        per_moment.append(jnp.stack(per_angle, axis=2))   # (nb, nf, nr, nz)
    return jnp.stack(per_moment, axis=0)                  # (nm, nb, nf, nr, nz)


if __name__ == "__main__":
    nb, nf, nx, ny, nz = 2, 2, 16, 16, 4
    nb_radiuses = 24
    moments = (0, 1, 2)
    sigma = 0.1

    key = jax.random.PRNGKey(0)
    k1, k2, k3 = jax.random.split(key, 3)
    x = jax.random.uniform(k1, (nb, nf, nx, ny, nz), dtype=jnp.float32)
    com_real = jax.random.uniform(k2, (nb, nf, nz), minval=4.0,
                                  maxval=float(ny) - 4.0, dtype=jnp.float32)
    com_imag = jax.random.uniform(k3, (nb, nf, nz), minval=4.0,
                                  maxval=float(nx) - 4.0, dtype=jnp.float32)
    center_of_mass = (com_real + 1j * com_imag).astype(jnp.complex64)

    out = moment_gaussian_radius_extractor(
        x, center_of_mass, moments=moments, nb_radiuses=nb_radiuses, sigma=sigma)
    out = jax.block_until_ready(out)

    ref = _reference(x, center_of_mass, moments, nb_radiuses, sigma)
    assert out.shape == (len(moments), nb, nf, nb_radiuses, nz)
    np.testing.assert_allclose(np.asarray(out), np.asarray(ref),
                               rtol=5e-2, atol=5e-2)
    print("KERNEL_OK")
</pallas_src>

<mosaic_0001>
module attributes {stable_mosaic.version = 11 : i64} {
  func.func @_radius_kernel(%arg0: i32, %arg1: memref<24x1xf32, #tpu.memory_space<vmem>>, %arg2: memref<1x256xf32, #tpu.memory_space<vmem>>, %arg3: memref<1x256xf32, #tpu.memory_space<vmem>>, %arg4: memref<8x1xf32, #tpu.memory_space<vmem>>, %arg5: memref<8x1xf32, #tpu.memory_space<vmem>>, %arg6: memref<8x256xf32, #tpu.memory_space<vmem>>, %arg7: memref<3x8x24xf32, #tpu.memory_space<vmem>>) attributes {dimension_semantics = [#tpu.dimension_semantics<parallel>], iteration_bounds = array<i64: 2>, scalar_prefetch = 0 : i64, scratch_operands = 0 : i64, tpu.core_type = #tpu.core_type<tc>, window_params = [{pipeline_mode = #tpu.pipeline_mode<synchronous>, transform_indices = @transform_0, window_bounds = array<i64: 24, 1>}, {pipeline_mode = #tpu.pipeline_mode<synchronous>, transform_indices = @transform_1, window_bounds = array<i64: 1, 256>}, {pipeline_mode = #tpu.pipeline_mode<synchronous>, transform_indices = @transform_2, window_bounds = array<i64: 1, 256>}, {transform_indices = @transform_3, window_bounds = array<i64: 8, 1>}, {transform_indices = @transform_4, window_bounds = array<i64: 8, 1>}, {transform_indices = @transform_5, window_bounds = array<i64: 8, 256>}, {transform_indices = @transform_6, window_bounds = array<i64: 3, 8, 24>}]} {
    %c0 = arith.constant 0 : index
    %c0_0 = arith.constant 0 : index
    %0 = vector.load %arg6[%c0, %c0_0] : memref<8x256xf32, #tpu.memory_space<vmem>>, vector<8x256xf32>
    %c0_1 = arith.constant 0 : index
    %c0_2 = arith.constant 0 : index
    %1 = vector.load %arg2[%c0_1, %c0_2] : memref<1x256xf32, #tpu.memory_space<vmem>>, vector<1x256xf32>
    %c0_3 = arith.constant 0 : index
    %c0_4 = arith.constant 0 : index
    %2 = vector.load %arg4[%c0_3, %c0_4] : memref<8x1xf32, #tpu.memory_space<vmem>>, vector<8x1xf32>
    %3 = vector.broadcast %1 : vector<1x256xf32> to vector<8x256xf32>
    %4 = vector.broadcast %2 : vector<8x1xf32> to vector<8x256xf32>
    %5 = arith.subf %3, %4 : vector<8x256xf32>
    %c0_5 = arith.constant 0 : index
    %c0_6 = arith.constant 0 : index
    %6 = vector.load %arg3[%c0_5, %c0_6] : memref<1x256xf32, #tpu.memory_space<vmem>>, vector<1x256xf32>
    %c0_7 = arith.constant 0 : index
    %c0_8 = arith.constant 0 : index
    %7 = vector.load %arg5[%c0_7, %c0_8] : memref<8x1xf32, #tpu.memory_space<vmem>>, vector<8x1xf32>
    %8 = vector.broadcast %6 : vector<1x256xf32> to vector<8x256xf32>
    %9 = vector.broadcast %7 : vector<8x1xf32> to vector<8x256xf32>
    %10 = arith.subf %8, %9 : vector<8x256xf32>
    %11 = math.atan2 %10, %5 : vector<8x256xf32>
    %12 = arith.mulf %5, %5 : vector<8x256xf32>
    %13 = arith.mulf %10, %10 : vector<8x256xf32>
    %14 = arith.addf %12, %13 : vector<8x256xf32>
    %15 = math.sqrt %14 : vector<8x256xf32>
    %16 = vector.shape_cast %0 : vector<8x256xf32> to vector<8x1x256xf32>
    %17 = arith.mulf %0, %15 : vector<8x256xf32>
    %18 = vector.shape_cast %17 : vector<8x256xf32> to vector<8x1x256xf32>
    %19 = arith.mulf %0, %14 : vector<8x256xf32>
    %20 = vector.shape_cast %19 : vector<8x256xf32> to vector<8x1x256xf32>
    %21 = vector.shape_cast %11 : vector<8x256xf32> to vector<8x1x256xf32>
    %c0_9 = arith.constant 0 : index
    %c0_10 = arith.constant 0 : index
    %22 = vector.load %arg1[%c0_9, %c0_10] : memref<24x1xf32, #tpu.memory_space<vmem>>, vector<24x1xf32>
    %23 = vector.shape_cast %22 : vector<24x1xf32> to vector<1x24x1xf32>
    %24 = vector.broadcast %21 : vector<8x1x256xf32> to vector<8x24x256xf32>
    %25 = vector.broadcast %23 : vector<1x24x1xf32> to vector<8x24x256xf32>
    %26 = arith.subf %24, %25 : vector<8x24x256xf32>
    %cst = arith.constant 0.159154937 : f32
    %27 = vector.broadcast %cst : f32 to vector<8x24x256xf32>
    %28 = arith.mulf %26, %27 : vector<8x24x256xf32>
    %cst_11 = arith.constant 5.000000e-01 : f32
    %29 = vector.broadcast %cst_11 : f32 to vector<8x24x256xf32>
    %30 = arith.addf %28, %29 : vector<8x24x256xf32>
    %31 = math.floor %30 : vector<8x24x256xf32>
    %cst_12 = arith.constant 6.28318548 : f32
    %32 = vector.broadcast %cst_12 : f32 to vector<8x24x256xf32>
    %33 = arith.mulf %32, %31 : vector<8x24x256xf32>
    %34 = arith.subf %26, %33 : vector<8x24x256xf32>
    %35 = arith.mulf %34, %34 : vector<8x24x256xf32>
    %cst_13 = arith.constant -5.000000e+01 : f32
    %36 = vector.broadcast %cst_13 : f32 to vector<8x24x256xf32>
    %37 = arith.mulf %35, %36 : vector<8x24x256xf32>
    %38 = math.exp %37 : vector<8x24x256xf32>
    %39 = vector.broadcast %16 : vector<8x1x256xf32> to vector<8x24x256xf32>
    %40 = arith.mulf %39, %38 : vector<8x24x256xf32>
    %cst_14 = arith.constant dense<0.000000e+00> : vector<8x24xf32>
    %41 = vector.multi_reduction <add>, %40, %cst_14 [2] : vector<8x24x256xf32> to vector<8x24xf32>
    %cst_15 = arith.constant 7.97884559 : f32
    %42 = vector.broadcast %cst_15 : f32 to vector<8x24xf32>
    %43 = arith.mulf %42, %41 : vector<8x24xf32>
    %44 = math.sqrt %43 : vector<8x24xf32>
    %c0_16 = arith.constant 0 : index
    %c0_17 = arith.constant 0 : index
    %c0_18 = arith.constant 0 : index
    %45 = vector.load %arg7[%c0_16, %c0_17, %c0_18] : memref<3x8x24xf32, #tpu.memory_space<vmem>>, vector<1x8x24xf32>
    %46 = vector.shape_cast %45 : vector<1x8x24xf32> to vector<8x24xf32>
    %47 = vector.shape_cast %44 : vector<8x24xf32> to vector<1x8x24xf32>
    tpu.vector_store %arg7[%c0_16, %c0_17, %c0_18], %47 {strides = array<i32>} : memref<3x8x24xf32, #tpu.memory_space<vmem>>, vector<1x8x24xf32>,
    %48 = vector.broadcast %18 : vector<8x1x256xf32> to vector<8x24x256xf32>
    %49 = arith.mulf %48, %38 : vector<8x24x256xf32>
    %cst_19 = arith.constant dense<0.000000e+00> : vector<8x24xf32>
    %50 = vector.multi_reduction <add>, %49, %cst_19 [2] : vector<8x24x256xf32> to vector<8x24xf32>
    %cst_20 = arith.constant 11.9682684 : f32
    %51 = vector.broadcast %cst_20 : f32 to vector<8x24xf32>
    %52 = arith.mulf %51, %50 : vector<8x24xf32>
    %53 = math.log %52 : vector<8x24xf32>
    %cst_21 = arith.constant 0.333333343 : f32
    %54 = vector.broadcast %cst_21 : f32 to vector<8x24xf32>
    %55 = arith.mulf %53, %54 : vector<8x24xf32>
    %56 = math.exp %55 : vector<8x24xf32>
    %c1 = arith.constant 1 : index
    %c0_22 = arith.constant 0 : index
    %c0_23 = arith.constant 0 : index
    %57 = vector.load %arg7[%c1, %c0_22, %c0_23] : memref<3x8x24xf32, #tpu.memory_space<vmem>>, vector<1x8x24xf32>
    %58 = vector.shape_cast %57 : vector<1x8x24xf32> to vector<8x24xf32>
    %59 = vector.shape_cast %56 : vector<8x24xf32> to vector<1x8x24xf32>
    tpu.vector_store %arg7[%c1, %c0_22, %c0_23], %59 {strides = array<i32>} : memref<3x8x24xf32, #tpu.memory_space<vmem>>, vector<1x8x24xf32>,
    %60 = vector.broadcast %20 : vector<8x1x256xf32> to vector<8x24x256xf32>
    %61 = arith.mulf %60, %38 : vector<8x24x256xf32>
    %cst_24 = arith.constant dense<0.000000e+00> : vector<8x24xf32>
    %62 = vector.multi_reduction <add>, %61, %cst_24 [2] : vector<8x24x256xf32> to vector<8x24xf32>
    %cst_25 = arith.constant 15.9576912 : f32
    %63 = vector.broadcast %cst_25 : f32 to vector<8x24xf32>
    %64 = arith.mulf %63, %62 : vector<8x24xf32>
    %65 = math.sqrt %64 : vector<8x24xf32>
    %66 = math.sqrt %65 : vector<8x24xf32>
    %c2 = arith.constant 2 : index
    %c0_26 = arith.constant 0 : index
    %c0_27 = arith.constant 0 : index
    %67 = vector.load %arg7[%c2, %c0_26, %c0_27] : memref<3x8x24xf32, #tpu.memory_space<vmem>>, vector<1x8x24xf32>
    %68 = vector.shape_cast %67 : vector<1x8x24xf32> to vector<8x24xf32>
    %69 = vector.shape_cast %66 : vector<8x24xf32> to vector<1x8x24xf32>
    tpu.vector_store %arg7[%c2, %c0_26, %c0_27], %69 {strides = array<i32>} : memref<3x8x24xf32, #tpu.memory_space<vmem>>, vector<1x8x24xf32>,
    return
  }
  func.func @transform_0(%arg0: i32) -> (i32, i32) {
    %c0_i32 = arith.constant 0 : i32
    %c0_i32_0 = arith.constant 0 : i32
    %c0_i32_1 = arith.constant 0 : i32
    return %c0_i32, %c0_i32_0 : i32, i32
  }
  func.func @transform_1(%arg0: i32) -> (i32, i32) {
    %c0_i32 = arith.constant 0 : i32
    %c0_i32_0 = arith.constant 0 : i32
    %c0_i32_1 = arith.constant 0 : i32
    return %c0_i32, %c0_i32_0 : i32, i32
  }
  func.func @transform_2(%arg0: i32) -> (i32, i32) {
    %c0_i32 = arith.constant 0 : i32
    %c0_i32_0 = arith.constant 0 : i32
    %c0_i32_1 = arith.constant 0 : i32
    return %c0_i32, %c0_i32_0 : i32, i32
  }
  func.func @transform_3(%arg0: i32) -> (i32, i32) {
    %c0_i32 = arith.constant 0 : i32
    %c0_i32_0 = arith.constant 0 : i32
    return %arg0, %c0_i32 : i32, i32
  }
  func.func @transform_4(%arg0: i32) -> (i32, i32) {
    %c0_i32 = arith.constant 0 : i32
    %c0_i32_0 = arith.constant 0 : i32
    return %arg0, %c0_i32 : i32, i32
  }
  func.func @transform_5(%arg0: i32) -> (i32, i32) {
    %c0_i32 = arith.constant 0 : i32
    %c0_i32_0 = arith.constant 0 : i32
    return %arg0, %c0_i32 : i32, i32
  }
  func.func @transform_6(%arg0: i32) -> (i32, i32, i32) {
    %c0_i32 = arith.constant 0 : i32
    %c0_i32_0 = arith.constant 0 : i32
    %c0_i32_1 = arith.constant 0 : i32
    return %c0_i32, %arg0, %c0_i32_0 : i32, i32, i32
  }
}

</mosaic_0001>

<llo_original>
// kernel: tpu_custom_call.1
$region0: #{tpu_custom_call.1}
  #allocation0 [shape = 'u32[]', space=smem, size = 0x4, offset = 0x4, fixed_abs, tag = 'smem constant byte address 0x4 - core index']
  #allocation1 [shape = 'u32[144,128]{1,0:T(1,128)}', space=vmem, size = 0x12000, scoped, tag = 'internal scratch']
  %s0 = inlined_call_operand.vmem [shape: f32[24,1], index: 0, kind: input, shape index: {}]
  %s1 = inlined_call_operand.vmem [shape: f32[1,256], index: 1, kind: input, shape index: {}]
  %s2 = inlined_call_operand.vmem [shape: f32[1,256], index: 2, kind: input, shape index: {}]
  %s3 = inlined_call_operand.vmem [shape: f32[16,1], index: 3, kind: input, shape index: {}]
  %s4 = inlined_call_operand.vmem [shape: f32[16,1], index: 4, kind: input, shape index: {}]
  %s5 = inlined_call_operand.vmem [shape: f32[16,256], index: 5, kind: input, shape index: {}]
  %s6 = inlined_call_operand.hbm [shape: f32[3,16,24], index: 6, kind: output, shape index: {}]
  %s7 = sld [smem:[#allocation0]]
  $region57: #{tpu_custom_call.1} parent=0
    _
  %s9 = ssub.s32 1, %s7
  %s10 = scalar_select 0, %s9, %s7
  $region1: #{tpu_custom_call.1} parent=0
    #allocation2 [shape = 'u8[24576]{0}', space=vmem, size = 0x6000, scoped, tag = 'output window, operand 0']
    #allocation3 [shape = 's32[2]{0}', space=sflag, size = 0x8, scoped, tag = 'scoped memory for tpu_custom_call.1']
    %11 = vsyncpa [#allocation3], 0
    %s12 = scalar_lea.sflag [#allocation3], 1
    %13 = vsyncpa %s12, 0
    loop: start=0, step=1, limit=4
    $region2: #{tpu_custom_call.1} parent=1 // loop_pre_header
      _
    $region3: #{tpu_custom_call.1} parent=1 // loop_header
      %s15 = sphi 0, %s19
      %p16 = scmp.ge.s32.totalorder %s15, 4
      %s23 = sphi 0, %s23
      %s25 = sphi 0, %s23
      %s26 = sphi 0, %s25
      %s40 = sphi 0, %s26
      %s44 = sphi 0, %s44
      %s46 = sphi 0, %s44
      %s47 = sphi 0, %s46
      %s61 = sphi 0, %s47
      %s65 = sphi 0, %s65
      %s67 = sphi 0, %s65
      %s68 = sphi 0, %s67
      %s82 = sphi 0, %s68
      %s88 = sphi 0, %s90
      %s91 = sphi 0, %s88
      %s92 = sphi 0, %s91
      %s108 = sphi 0, %s92
      %s114 = sphi 0, %s116
      %s117 = sphi 0, %s114
      %s118 = sphi 0, %s117
      %s134 = sphi 0, %s118
      %s140 = sphi 0, %s142
      %s143 = sphi 0, %s140
      %s144 = sphi 0, %s143
      %s160 = sphi 0, %s144
      %s166 = sphi 0, %s168
      %s169 = sphi 0, %s166
      %s170 = sphi 0, %s169
      %s186 = sphi 0, %s170
    $region4: #{tpu_custom_call.1} parent=1 // loop_header_branch
      %18 = sbr.rel (%p16) target = $region8
    $region5: #{tpu_custom_call.1} parent=1 // loop_body
      %s20 = ssub.s32 %s15, 1
      %s21 = ssub.s32 %s15, 2
      %s22 = sadd.s32 %s15, 1
      %s24 = sadd.s32 %s23, 1
      %p27 = scmp.eq.s32.totalorder %s15, 1
      %p28 = scmp.ne.s32.totalorder %s23, %s25
      %p29 = scmp.eq.s32.totalorder %s15, 0
      %p30 = por %p28, %p29
      %p31 = scmp.ne.s32.totalorder %s23, %s25
      %p32 = scmp.eq.s32.totalorder %s20, 1
      %p33 = por %p31, %p32
      %p34 = scmp.ne.s32.totalorder %s25, %s26
      %p35 = scmp.eq.s32.totalorder %s20, 0
      %p36 = por %p34, %p35
      %p37 = scmp.ne.s32.totalorder %s25, %s26
      %p38 = scmp.eq.s32.totalorder %s21, 1
      %p39 = por %p37, %p38
      %p41 = scmp.ne.s32.totalorder %s26, %s40
      %p42 = scmp.eq.s32.totalorder %s21, 0
      %p43 = por %p41, %p42
      %s45 = sadd.s32 %s44, 1
      %p48 = scmp.eq.s32.totalorder %s15, 1
      %p49 = scmp.ne.s32.totalorder %s44, %s46
      %p50 = scmp.eq.s32.totalorder %s15, 0
      %p51 = por %p49, %p50
      %p52 = scmp.ne.s32.totalorder %s44, %s46
      %p53 = scmp.eq.s32.totalorder %s20, 1
      %p54 = por %p52, %p53
      %p55 = scmp.ne.s32.totalorder %s46, %s47
      %p56 = scmp.eq.s32.totalorder %s20, 0
      %p57 = por %p55, %p56
      %p58 = scmp.ne.s32.totalorder %s46, %s47
      %p59 = scmp.eq.s32.totalorder %s21, 1
      %p60 = por %p58, %p59
      %p62 = scmp.ne.s32.totalorder %s47, %s61
      %p63 = scmp.eq.s32.totalorder %s21, 0
      %p64 = por %p62, %p63
      %s66 = sadd.s32 %s65, 1
      %p69 = scmp.eq.s32.totalorder %s15, 1
      %p70 = scmp.ne.s32.totalorder %s65, %s67
      %p71 = scmp.eq.s32.totalorder %s15, 0
      %p72 = por %p70, %p71
      %p73 = scmp.ne.s32.totalorder %s65, %s67
      %p74 = scmp.eq.s32.totalorder %s20, 1
      %p75 = por %p73, %p74
      %p76 = scmp.ne.s32.totalorder %s67, %s68
      %p77 = scmp.eq.s32.totalorder %s20, 0
      %p78 = por %p76, %p77
      %p79 = scmp.ne.s32.totalorder %s67, %s68
      %p80 = scmp.eq.s32.totalorder %s21, 1
      %p81 = por %p79, %p80
      %p83 = scmp.ne.s32.totalorder %s68, %s82
      %p84 = scmp.eq.s32.totalorder %s21, 0
      %p85 = por %p83, %p84
      %s86 = ssub.s32 %s15, %s22
      %p87 = scmp.eq.s32.totalorder %s86, 0
      %s89 = sadd.s32 %s88, 1
      %s90 = scalar_select %p87, %s88, %s89
      %p93 = pneg %p87
      %p94 = scmp.eq.s32.totalorder %s15, 1
      %p95 = por %p93, %p94
      %p96 = scmp.ne.s32.totalorder %s88, %s91
      %p97 = scmp.eq.s32.totalorder %s15, 0
      %p98 = por %p96, %p97
      %p99 = scmp.ne.s32.totalorder %s88, %s91
      %p100 = scmp.eq.s32.totalorder %s20, 1
      %p101 = por %p99, %p100
      %p102 = scmp.ne.s32.totalorder %s91, %s92
      %p103 = scmp.eq.s32.totalorder %s20, 0
      %p104 = por %p102, %p103
      %p105 = scmp.ne.s32.totalorder %s91, %s92
      %p106 = scmp.eq.s32.totalorder %s21, 1
      %p107 = por %p105, %p106
      %p109 = scmp.ne.s32.totalorder %s92, %s108
      %p110 = scmp.eq.s32.totalorder %s21, 0
      %p111 = por %p109, %p110
      %s112 = ssub.s32 %s15, %s22
      %p113 = scmp.eq.s32.totalorder %s112, 0
      %s115 = sadd.s32 %s114, 1
      %s116 = scalar_select %p113, %s114, %s115
      %p119 = pneg %p113
      %p120 = scmp.eq.s32.totalorder %s15, 1
      %p121 = por %p119, %p120
      %p122 = scmp.ne.s32.totalorder %s114, %s117
      %p123 = scmp.eq.s32.totalorder %s15, 0
      %p124 = por %p122, %p123
      %p125 = scmp.ne.s32.totalorder %s114, %s117
      %p126 = scmp.eq.s32.totalorder %s20, 1
      %p127 = por %p125, %p126
      %p128 = scmp.ne.s32.totalorder %s117, %s118
      %p129 = scmp.eq.s32.totalorder %s20, 0
      %p130 = por %p128, %p129
      %p131 = scmp.ne.s32.totalorder %s117, %s118
      %p132 = scmp.eq.s32.totalorder %s21, 1
      %p133 = por %p131, %p132
      %p135 = scmp.ne.s32.totalorder %s118, %s134
      %p136 = scmp.eq.s32.totalorder %s21, 0
      %p137 = por %p135, %p136
      %s138 = ssub.s32 %s15, %s22
      %p139 = scmp.eq.s32.totalorder %s138, 0
      %s141 = sadd.s32 %s140, 1
      %s142 = scalar_select %p139, %s140, %s141
      %p145 = pneg %p139
      %p146 = scmp.eq.s32.totalorder %s15, 1
      %p147 = por %p145, %p146
      %p148 = scmp.ne.s32.totalorder %s140, %s143
      %p149 = scmp.eq.s32.totalorder %s15, 0
      %p150 = por %p148, %p149
      %p151 = scmp.ne.s32.totalorder %s140, %s143
      %p152 = scmp.eq.s32.totalorder %s20, 1
      %p153 = por %p151, %p152
      %p154 = scmp.ne.s32.totalorder %s143, %s144
      %p155 = scmp.eq.s32.totalorder %s20, 0
      %p156 = por %p154, %p155
      %p157 = scmp.ne.s32.totalorder %s143, %s144
      %p158 = scmp.eq.s32.totalorder %s21, 1
      %p159 = por %p157, %p158
      %p161 = scmp.ne.s32.totalorder %s144, %s160
      %p162 = scmp.eq.s32.totalorder %s21, 0
      %p163 = por %p161, %p162
      %s164 = ssub.s32 %s15, %s22
      %p165 = scmp.eq.s32.totalorder %s164, 0
      %s167 = sadd.s32 %s166, 1
      %s168 = scalar_select %p165, %s166, %s167
      %p171 = pneg %p165
      %p172 = scmp.eq.s32.totalorder %s15, 1
      %p173 = por %p171, %p172
      %p174 = scmp.ne.s32.totalorder %s166, %s169
      %p175 = scmp.eq.s32.totalorder %s15, 0
      %p176 = por %p174, %p175
      %p177 = scmp.ne.s32.totalorder %s166, %s169
      %p178 = scmp.eq.s32.totalorder %s20, 1
      %p179 = por %p177, %p178
      %p180 = scmp.ne.s32.totalorder %s169, %s170
      %p181 = scmp.eq.s32.totalorder %s20, 0
      %p182 = por %p180, %p181
      %p183 = scmp.ne.s32.totalorder %s169, %s170
      %p184 = scmp.eq.s32.totalorder %s21, 1
      %p185 = por %p183, %p184
      %p187 = scmp.ne.s32.totalorder %s170, %s186
      %p188 = scmp.eq.s32.totalorder %s21, 0
      %p189 = por %p187, %p188
      %p190 = scmp.le.s32.totalorder 1, %s15
      %p191 = scmp.lt.s32.totalorder %s15, 3
      %p192 = pnand %p190, %p191
      %p193 = pneg %p192
      // Predicated region
      $region9: #{tpu_custom_call.1} parent=5 // pred_check
        _
      $region10: #{tpu_custom_call.1} parent=5 // pred_check_branch
        %195 = sbr.rel (%p192) target = $region12
      $region11: #{tpu_custom_call.1} parent=5 // pred_region
        %s196 = ssub.s32 %s15, 1
        // Predicated region
        $region13: #{tpu_custom_call.1} parent=11 // pred_check
          %p197 = pneg %p36
        $region14: #{tpu_custom_call.1} parent=11 // pred_check_branch
          %199 = sbr.rel (%p197) target = $region16
        $region15: #{tpu_custom_call.1} parent=11 // pred_region
          _
        $region16: #{tpu_custom_call.1} parent=11 // pred_fallthru
          _
        // Predicated region
        $region17: #{tpu_custom_call.1} parent=11 // pred_check
          %p200 = pneg %p57
        $region18: #{tpu_custom_call.1} parent=11 // pred_check_branch
          %202 = sbr.rel (%p200) target = $region20
        $region19: #{tpu_custom_call.1} parent=11 // pred_region
          _
        $region20: #{tpu_custom_call.1} parent=11 // pred_fallthru
          _
        // Predicated region
        $region21: #{tpu_custom_call.1} parent=11 // pred_check
          %p203 = pneg %p78
        $region22: #{tpu_custom_call.1} parent=11 // pred_check_branch
          %205 = sbr.rel (%p203) target = $region24
        $region23: #{tpu_custom_call.1} parent=11 // pred_region
          _
        $region24: #{tpu_custom_call.1} parent=11 // pred_fallthru
          _
      $region12: #{tpu_custom_call.1} parent=5 // pred_fallthru
        _
      %p206 = scmp.lt.s32.totalorder %s15, 2
      // Predicated region
      $region25: #{tpu_custom_call.1} parent=5 // pred_check
        %p207 = pneg %p206
      $region26: #{tpu_custom_call.1} parent=5 // pred_check_branch
        %209 = sbr.rel (%p207) target = $region28
      $region27: #{tpu_custom_call.1} parent=5 // pred_region
        // Predicated region
        $region29: #{tpu_custom_call.1} parent=27 // pred_check
          %p210 = pneg %p98
        $region30: #{tpu_custom_call.1} parent=27 // pred_check_branch
          %212 = sbr.rel (%p210) target = $region32
        $region31: #{tpu_custom_call.1} parent=27 // pred_region
          %p213 = scmp.lt.s32.totalorder %s15, 1
          %s214 = scalar_select %p213, %s15, 1
          %s215 = smul.addr %s214, 8
          %s216 = scalar_lea.vmem %s3, %s215
        $region32: #{tpu_custom_call.1} parent=27 // pred_fallthru
          _
        // Predicated region
        $region33: #{tpu_custom_call.1} parent=27 // pred_check
          %p217 = pneg %p124
        $region34: #{tpu_custom_call.1} parent=27 // pred_check_branch
          %219 = sbr.rel (%p217) target = $region36
        $region35: #{tpu_custom_call.1} parent=27 // pred_region
          %p220 = scmp.lt.s32.totalorder %s15, 1
          %s221 = scalar_select %p220, %s15, 1
          %s222 = smul.addr %s221, 8
          %s223 = scalar_lea.vmem %s4, %s222
        $region36: #{tpu_custom_call.1} parent=27 // pred_fallthru
          _
        // Predicated region
        $region37: #{tpu_custom_call.1} parent=27 // pred_check
          %p224 = pneg %p150
        $region38: #{tpu_custom_call.1} parent=27 // pred_check_branch
          %226 = sbr.rel (%p224) target = $region40
        $region39: #{tpu_custom_call.1} parent=27 // pred_region
          %p227 = scmp.lt.s32.totalorder %s15, 1
          %s228 = scalar_select %p227, %s15, 1
          %s229 = smul.addr %s228, 2
          %s230 = smul.addr %s229, 8
          %s231 = scalar_lea.vmem %s5, %s230
        $region40: #{tpu_custom_call.1} parent=27 // pred_fallthru
          _
      $region28: #{tpu_custom_call.1} parent=5 // pred_fallthru
        _
      %p232 = scmp.le.s32.totalorder 1, %s15
      %p233 = scmp.lt.s32.totalorder %s15, 3
      %p234 = pnand %p232, %p233
      %p235 = pneg %p234
      // Predicated region
      $region41: #{tpu_custom_call.1} parent=5 // pred_check
        _
      $region42: #{tpu_custom_call.1} parent=5 // pred_check_branch
        %237 = sbr.rel (%p234) target = $region44
      $region43: #{tpu_custom_call.1} parent=5 // pred_region
        %s238 = ssub.s32 %s15, 1
        %p239 = pneg %p36
        %p240 = pneg %p33
        %p241 = pneg %p57
        %p242 = pneg %p54
        %p243 = pneg %p78
        %p244 = pneg %p75
        %p245 = scmp.lt.s32.totalorder %s20, 1
        %s246 = scalar_select %p245, %s20, 1
        %s247 = smul.addr %s246, 8
        %s248 = scalar_lea.vmem %s3, %s247
        %p249 = pneg %p104
        %p250 = pneg %p101
        %p251 = scmp.lt.s32.totalorder %s20, 1
        %s252 = scalar_select %p251, %s20, 1
        %s253 = smul.addr %s252, 8
        %s254 = scalar_lea.vmem %s4, %s253
        %p255 = pneg %p130
        %p256 = pneg %p127
        %p257 = scmp.lt.s32.totalorder %s20, 1
        %s258 = scalar_select %p257, %s20, 1
        %s259 = smul.addr %s258, 2
        %s260 = smul.addr %s259, 8
        %s261 = scalar_lea.vmem %s5, %s260
        %p262 = pneg %p156
        %p263 = pneg %p153
        %p264 = pneg %p182
        %p265 = pneg %p179
        %s266 = sand.u32 %s169, 1
        %s267 = scalar_lea.sflag [#allocation3], %s266
        %s268 = sand.u32 %s169, 1
        %s269 = smul.addr %s268, 24
        %s270 = scalar_lea.vmem [#allocation2], %s269
        %p271 = scmp.lt.s32.totalorder %s20, 1
        %s272 = scalar_select %p271, %s20, 1
        %s273 = smul.addr %s272, 8
        %s274 = scalar_lea.vmem %s3, %s273
        %p275 = scmp.lt.s32.totalorder %s20, 1
        %s276 = scalar_select %p275, %s20, 1
        %s277 = smul.addr %s276, 8
        %s278 = scalar_lea.vmem %s4, %s277
        %p279 = scmp.lt.s32.totalorder %s20, 1
        %s280 = scalar_select %p279, %s20, 1
        %s281 = smul.addr %s280, 2
        %s282 = smul.addr %s281, 8
        %s283 = scalar_lea.vmem %s5, %s282
        %v284 = vld [vmem:[%s283] sm:$0xff]
        %v285 = vld [vmem:[%s283 + $0x8] sm:$0xff]
        %v286 = vld [vmem:[%s1] sm:$0x3]
        %v287 = vld [vmem:[%s274] sm:$0xff]
        %v289 = vlaneseq
        %v290 = vshrl.u32 %v289, 7
        %v291 = vsub.s32 0, %v290
        %v292 = vrot.slane %v286, %v291
        %v293 = vlaneseq
        %v294 = vshrl.u32 %v293, 7
        %v295 = vsub.s32 1, %v294
        %v296 = vrot.slane %v286, %v295
        %300 = vset.pattern.permute.xlu0 0
        %301 = vperm.xlu0 %300, %v287
        %v302 = vpop.permute.xlu0 %301
        %v304 = vsub.f32 %v292, %v302
        %v305 = vsub.f32 %v296, %v302
        %v306 = vld [vmem:[%s2] sm:$0x3]
        %v307 = vld [vmem:[%s278] sm:$0xff]
        %v309 = vlaneseq
        %v310 = vshrl.u32 %v309, 7
        %v311 = vsub.s32 0, %v310
        %v312 = vrot.slane %v306, %v311
        %v313 = vlaneseq
        %v314 = vshrl.u32 %v313, 7
        %v315 = vsub.s32 1, %v314
        %v316 = vrot.slane %v306, %v315
        %320 = vset.pattern.permute.xlu0 0
        %321 = vperm.xlu0 %320, %v307
        %v322 = vpop.permute.xlu0 %321
        %v324 = vsub.f32 %v312, %v322
        %v325 = vsub.f32 %v316, %v322
        %v326 = vand.u32 2147483647, %v304
        %v327 = vand.u32 2147483647, %v324
        %v328 = vmin.f32 %v326, %v327
        %v329 = vmax.f32 %v326, %v327
        %v330 = vrcp.pop %v329
        %v331 = vmul.f32 %v328, %v330
        %v332 = vmul.f32 %v331, %v331
        %v333 = vmul.f32 0.002785687, %v332
        %v334 = vadd.f32 %v333, -0.015866
        %v335 = vmul.f32 %v334, %v332
        %v336 = vadd.f32 %v335, 0.04247222
        %v337 = vmul.f32 %v336, %v332
        %v338 = vadd.f32 %v337, -0.074975304
        %v339 = vmul.f32 %v338, %v332
        %v340 = vadd.f32 %v339, 0.1064488
        %v341 = vmul.f32 %v340, %v332
        %v342 = vadd.f32 %v341, -0.14207031
        %v343 = vmul.f32 %v342, %v332
        %v344 = vadd.f32 %v343, 0.19993454
        %v345 = vmul.f32 %v344, %v332
        %v346 = vadd.f32 %v345, -0.33333147
        %v347 = vmul.f32 %v346, %v332
        %v348 = vmul.f32 %v347, %v331
        %v349 = vadd.f32 %v348, %v331
        %vm350 = vcmp.gt.f32.partialorder %v327, %v326
        %v351 = vsub.f32 1.5707964, %v349
        %v352 = vsel %vm350, %v351, %v349
        %vm353 = vcmp.lt.f32.partialorder %v304, 0.0
        %v354 = vsub.f32 3.1415927, %v352
        %v355 = vsel %vm353, %v354, %v352
        %vm356 = vcmp.lt.s32.totalorder %v304, 0
        %v357 = vsel %vm356, 3.1415927, 0.0
        %vm358 = vcmp.eq.f32.partialorder %v324, 0.0
        %v359 = vsel %vm358, %v357, %v355
        %vm360 = vcmp.ne.f32.partialorder %v304, %v304
        %vm361 = vcmp.ne.f32.partialorder %v324, %v324
        %vm362 = vmor %vm360, %vm361
        %v363 = vsel %vm362, nan, %v359
        %vm364 = vcmp.lt.f32.partialorder %v304, 0.0
        %v365 = vsel %vm364, 2.3561945, 0.7853982
        %vm366 = vcmp.eq.s32.totalorder %v326, inf
        %vm367 = vcmp.eq.s32.totalorder %v327, inf
        %vm368 = vmand %vm366, %vm367
        %v369 = vsel %vm368, %v365, %v363
        %v370 = vand.u32 2147483647, %v369
        %v371 = vand.u32 %v324, 2147483648
        %v372 = vor.u32 %v370, %v371
        %v373 = vand.u32 2147483647, %v305
        %v374 = vand.u32 2147483647, %v325
        %v375 = vmin.f32 %v373, %v374
        %v376 = vmax.f32 %v373, %v374
        %v377 = vrcp.pop %v376
        %v378 = vmul.f32 %v375, %v377
        %v379 = vmul.f32 %v378, %v378
        %v380 = vmul.f32 0.002785687, %v379
        %v381 = vadd.f32 %v380, -0.015866
        %v382 = vmul.f32 %v381, %v379
        %v383 = vadd.f32 %v382, 0.04247222
        %v384 = vmul.f32 %v383, %v379
        %v385 = vadd.f32 %v384, -0.074975304
        %v386 = vmul.f32 %v385, %v379
        %v387 = vadd.f32 %v386, 0.1064488
        %v388 = vmul.f32 %v387, %v379
        %v389 = vadd.f32 %v388, -0.14207031
        %v390 = vmul.f32 %v389, %v379
        %v391 = vadd.f32 %v390, 0.19993454
        %v392 = vmul.f32 %v391, %v379
        %v393 = vadd.f32 %v392, -0.33333147
        %v394 = vmul.f32 %v393, %v379
        %v395 = vmul.f32 %v394, %v378
        %v396 = vadd.f32 %v395, %v378
        %vm397 = vcmp.gt.f32.partialorder %v374, %v373
        %v398 = vsub.f32 1.5707964, %v396
        %v399 = vsel %vm397, %v398, %v396
        %vm400 = vcmp.lt.f32.partialorder %v305, 0.0
        %v401 = vsub.f32 3.1415927, %v399
        %v402 = vsel %vm400, %v401, %v399
        %vm403 = vcmp.lt.s32.totalorder %v305, 0
        %v404 = vsel %vm403, 3.1415927, 0.0
        %vm405 = vcmp.eq.f32.partialorder %v325, 0.0
        %v406 = vsel %vm405, %v404, %v402
        %vm407 = vcmp.ne.f32.partialorder %v305, %v305
        %vm408 = vcmp.ne.f32.partialorder %v325, %v325
        %vm409 = vmor %vm407, %vm408
        %v410 = vsel %vm409, nan, %v406
        %vm411 = vcmp.lt.f32.partialorder %v305, 0.0
        %v412 = vsel %vm411, 2.3561945, 0.7853982
        %vm413 = vcmp.eq.s32.totalorder %v373, inf
        %vm414 = vcmp.eq.s32.totalorder %v374, inf
        %vm415 = vmand %vm413, %vm414
        %v416 = vsel %vm415, %v412, %v410
        %v417 = vand.u32 2147483647, %v416
        %v418 = vand.u32 %v325, 2147483648
        %v419 = vor.u32 %v417, %v418
        %v420 = vmul.f32 %v304, %v304
        %v421 = vmul.f32 %v305, %v305
        %v422 = vmul.f32 %v324, %v324
        %v423 = vmul.f32 %v325, %v325
        %v424 = vadd.f32 %v420, %v422
        %v425 = vadd.f32 %v421, %v423
        %v426 = vrsqrt.pop %v424
        %v427 = vmul.f32 %v424, %v426
        %vm428 = vcmp.eq.f32.partialorder %v424, inf
        %v429 = vsel %vm428, %v424, %v427
        %vm430 = vcmp.eq.f32.partialorder %v424, 0.0
        %v431 = vand.u32 %v424, 2147483648
        %v432 = vsel %vm430, %v431, %v429
        %v433 = vrsqrt.pop %v425
        %v434 = vmul.f32 %v425, %v433
        %vm435 = vcmp.eq.f32.partialorder %v425, inf
        %v436 = vsel %vm435, %v425, %v434
        %vm437 = vcmp.eq.f32.partialorder %v425, 0.0
        %v438 = vand.u32 %v425, 2147483648
        %v439 = vsel %vm437, %v438, %v436
        %v442 = vcombine.low %v284, %v285
        %v443 = vcombine.high %v284, %v285
        %v445 = vunpack.c.l.s4 1966171168
        %v446 = vunpack.c.0.s8 %v445
        %v447 = vlaneseq
        %v448 = vshrl.u32 %v447, 7
        %v449 = vsub.s32 %v446, %v448
        %v450 = vrot.slane %v442, %v449
        %v452 = vunpack.c.l.s4 1966171168
        %v453 = vunpack.c.0.s8 %v452
        %v454 = vlaneseq
        %v455 = vshrl.u32 %v454, 7
        %v456 = vsub.s32 %v453, %v455
        %v457 = vrot.slane %v443, %v456
        %v458 = vcombine.high %v450, %v450
        %v459 = vcombine.high %v457, %v457
        %v461 = vunpack.c.l.s4 1966171168
        %v462 = vunpack.c.0.s8 %v461
        %v463 = vlaneseq
        %v464 = vshrl.u32 %v463, 7
        %v465 = vsub.s32 %v462, %v464
        %v466 = vrot.slane %v450, %v465
        %v468 = vunpack.c.l.s4 1966171168
        %v469 = vunpack.c.0.s8 %v468
        %v470 = vlaneseq
        %v471 = vshrl.u32 %v470, 7
        %v472 = vsub.s32 %v469, %v471
        %v473 = vrot.slane %v457, %v472
        %v475 = vunpack.c.l.s4 1966171168
        %v476 = vunpack.c.0.s8 %v475
        %v477 = vlaneseq
        %v478 = vshrl.u32 %v477, 7
        %v479 = vsub.s32 %v476, %v478
        %v480 = vrot.slane %v458, %v479
        %v482 = vunpack.c.l.s4 1966171168
        %v483 = vunpack.c.0.s8 %v482
        %v484 = vlaneseq
        %v485 = vshrl.u32 %v484, 7
        %v486 = vsub.s32 %v483, %v485
        %v487 = vrot.slane %v459, %v486
        %v488 = vcombine.high %v466, %v466
        %v489 = vcombine.high %v473, %v473
        %v490 = vcombine.high %v480, %v480
        %v491 = vcombine.high %v487, %v487
        %v492 = vmul.f32 %v284, %v432
        %v493 = vmul.f32 %v285, %v439
        %v496 = vcombine.low %v492, %v493
        %v497 = vcombine.high %v492, %v493
        %v499 = vunpack.c.l.s4 1966171168
        %v500 = vunpack.c.0.s8 %v499
        %v501 = vlaneseq
        %v502 = vshrl.u32 %v501, 7
        %v503 = vsub.s32 %v500, %v502
        %v504 = vrot.slane %v496, %v503
        %v506 = vunpack.c.l.s4 1966171168
        %v507 = vunpack.c.0.s8 %v506
        %v508 = vlaneseq
        %v509 = vshrl.u32 %v508, 7
        %v510 = vsub.s32 %v507, %v509
        %v511 = vrot.slane %v497, %v510
        %v512 = vcombine.high %v504, %v504
        %v513 = vcombine.high %v511, %v511
        %v515 = vunpack.c.l.s4 1966171168
        %v516 = vunpack.c.0.s8 %v515
        %v517 = vlaneseq
        %v518 = vshrl.u32 %v517, 7
        %v519 = vsub.s32 %v516, %v518
        %v520 = vrot.slane %v504, %v519
        %v522 = vunpack.c.l.s4 1966171168
        %v523 = vunpack.c.0.s8 %v522
        %v524 = vlaneseq
        %v525 = vshrl.u32 %v524, 7
        %v526 = vsub.s32 %v523, %v525
        %v527 = vrot.slane %v511, %v526
        %v529 = vunpack.c.l.s4 1966171168
        %v530 = vunpack.c.0.s8 %v529
        %v531 = vlaneseq
        %v532 = vshrl.u32 %v531, 7
        %v533 = vsub.s32 %v530, %v532
        %v534 = vrot.slane %v512, %v533
        %v536 = vunpack.c.l.s4 1966171168
        %v537 = vunpack.c.0.s8 %v536
        %v538 = vlaneseq
        %v539 = vshrl.u32 %v538, 7
        %v540 = vsub.s32 %v537, %v539
        %v541 = vrot.slane %v513, %v540
        %v542 = vcombine.high %v520, %v520
        %v543 = vcombine.high %v527, %v527
        %v544 = vcombine.high %v534, %v534
        %v545 = vcombine.high %v541, %v541
        %v546 = vmul.f32 %v284, %v424
        %v547 = vmul.f32 %v285, %v425
        %v550 = vcombine.low %v546, %v547
        %v551 = vcombine.high %v546, %v547
        %v553 = vunpack.c.l.s4 1966171168
        %v554 = vunpack.c.0.s8 %v553
        %v555 = vlaneseq
        %v556 = vshrl.u32 %v555, 7
        %v557 = vsub.s32 %v554, %v556
        %v558 = vrot.slane %v550, %v557
        %v560 = vunpack.c.l.s4 1966171168
        %v561 = vunpack.c.0.s8 %v560
        %v562 = vlaneseq
        %v563 = vshrl.u32 %v562, 7
        %v564 = vsub.s32 %v561, %v563
        %v565 = vrot.slane %v551, %v564
        %v566 = vcombine.high %v558, %v558
        %v567 = vcombine.high %v565, %v565
        %v569 = vunpack.c.l.s4 1966171168
        %v570 = vunpack.c.0.s8 %v569
        %v571 = vlaneseq
        %v572 = vshrl.u32 %v571, 7
        %v573 = vsub.s32 %v570, %v572
        %v574 = vrot.slane %v558, %v573
        %v576 = vunpack.c.l.s4 1966171168
        %v577 = vunpack.c.0.s8 %v576
        %v578 = vlaneseq
        %v579 = vshrl.u32 %v578, 7
        %v580 = vsub.s32 %v577, %v579
        %v581 = vrot.slane %v565, %v580
        %v583 = vunpack.c.l.s4 1966171168
        %v584 = vunpack.c.0.s8 %v583
        %v585 = vlaneseq
        %v586 = vshrl.u32 %v585, 7
        %v587 = vsub.s32 %v584, %v586
        %v588 = vrot.slane %v566, %v587
        %v590 = vunpack.c.l.s4 1966171168
        %v591 = vunpack.c.0.s8 %v590
        %v592 = vlaneseq
        %v593 = vshrl.u32 %v592, 7
        %v594 = vsub.s32 %v591, %v593
        %v595 = vrot.slane %v567, %v594
        %v596 = vcombine.high %v574, %v574
        %v597 = vcombine.high %v581, %v581
        %v598 = vcombine.high %v588, %v588
        %v599 = vcombine.high %v595, %v595
        %v602 = vcombine.low %v372, %v419
        %v603 = vcombine.high %v372, %v419
        %v605 = vunpack.c.l.s4 1966171168
        %v606 = vunpack.c.0.s8 %v605
        %v607 = vlaneseq
        %v608 = vshrl.u32 %v607, 7
        %v609 = vsub.s32 %v606, %v608
        %v610 = vrot.slane %v602, %v609
        %v612 = vunpack.c.l.s4 1966171168
        %v613 = vunpack.c.0.s8 %v612
        %v614 = vlaneseq
        %v615 = vshrl.u32 %v614, 7
        %v616 = vsub.s32 %v613, %v615
        %v617 = vrot.slane %v603, %v616
        %v618 = vcombine.high %v610, %v610
        %v619 = vcombine.high %v617, %v617
        %v621 = vunpack.c.l.s4 1966171168
        %v622 = vunpack.c.0.s8 %v621
        %v623 = vlaneseq
        %v624 = vshrl.u32 %v623, 7
        %v625 = vsub.s32 %v622, %v624
        %v626 = vrot.slane %v610, %v625
        %v628 = vunpack.c.l.s4 1966171168
        %v629 = vunpack.c.0.s8 %v628
        %v630 = vlaneseq
        %v631 = vshrl.u32 %v630, 7
        %v632 = vsub.s32 %v629, %v631
        %v633 = vrot.slane %v617, %v632
        %v635 = vunpack.c.l.s4 1966171168
        %v636 = vunpack.c.0.s8 %v635
        %v637 = vlaneseq
        %v638 = vshrl.u32 %v637, 7
        %v639 = vsub.s32 %v636, %v638
        %v640 = vrot.slane %v618, %v639
        %v642 = vunpack.c.l.s4 1966171168
        %v643 = vunpack.c.0.s8 %v642
        %v644 = vlaneseq
        %v645 = vshrl.u32 %v644, 7
        %v646 = vsub.s32 %v643, %v645
        %v647 = vrot.slane %v619, %v646
        %v648 = vcombine.high %v626, %v626
        %v649 = vcombine.high %v633, %v633
        %v650 = vcombine.high %v640, %v640
        %v651 = vcombine.high %v647, %v647
        %v652 = vld [vmem:[%s0] sm:$0xff]
        %v653 = vld [vmem:[%s0 + $0x8] sm:$0xff]
        %v654 = vld [vmem:[%s0 + $0x10] sm:$0xff]
        %v655 = vlaneseq
        %v656 = vshrl.u32 %v655, 7
        %v657 = vsub.s32 0, %v656
        %v658 = vrot.slane %v626, %v657
        %v659 = vlaneseq
        %v660 = vshrl.u32 %v659, 7
        %v661 = vsub.s32 1, %v660
        %v662 = vrot.slane %v626, %v661
        %v663 = vlaneseq
        %v664 = vshrl.u32 %v663, 7
        %v665 = vsub.s32 0, %v664
        %v666 = vrot.slane %v640, %v665
        %v667 = vlaneseq
        %v668 = vshrl.u32 %v667, 7
        %v669 = vsub.s32 1, %v668
        %v670 = vrot.slane %v640, %v669
        %v671 = vlaneseq
        %v672 = vshrl.u32 %v671, 7
        %v673 = vsub.s32 0, %v672
        %v674 = vrot.slane %v648, %v673
        %v675 = vlaneseq
        %v676 = vshrl.u32 %v675, 7
        %v677 = vsub.s32 1, %v676
        %v678 = vrot.slane %v648, %v677
        %v679 = vlaneseq
        %v680 = vshrl.u32 %v679, 7
        %v681 = vsub.s32 0, %v680
        %v682 = vrot.slane %v650, %v681
        %v683 = vlaneseq
        %v684 = vshrl.u32 %v683, 7
        %v685 = vsub.s32 1, %v684
        %v686 = vrot.slane %v650, %v685
        %v687 = vlaneseq
        %v688 = vshrl.u32 %v687, 7
        %v689 = vsub.s32 0, %v688
        %v690 = vrot.slane %v633, %v689
        %v691 = vlaneseq
        %v692 = vshrl.u32 %v691, 7
        %v693 = vsub.s32 1, %v692
        %v694 = vrot.slane %v633, %v693
        %v695 = vlaneseq
        %v696 = vshrl.u32 %v695, 7
        %v697 = vsub.s32 0, %v696
        %v698 = vrot.slane %v647, %v697
        %v699 = vlaneseq
        %v700 = vshrl.u32 %v699, 7
        %v701 = vsub.s32 1, %v700
        %v702 = vrot.slane %v647, %v701
        %v703 = vlaneseq
        %v704 = vshrl.u32 %v703, 7
        %v705 = vsub.s32 0, %v704
        %v706 = vrot.slane %v649, %v705
        %v707 = vlaneseq
        %v708 = vshrl.u32 %v707, 7
        %v709 = vsub.s32 1, %v708
        %v710 = vrot.slane %v649, %v709
        %v711 = vlaneseq
        %v712 = vshrl.u32 %v711, 7
        %v713 = vsub.s32 0, %v712
        %v714 = vrot.slane %v651, %v713
        %v715 = vlaneseq
        %v716 = vshrl.u32 %v715, 7
        %v717 = vsub.s32 1, %v716
        %v718 = vrot.slane %v651, %v717
        %736 = vset.pattern.permute.xlu0 0
        %737 = vperm.xlu0 %736, %v652
        %v738 = vpop.permute.xlu0 %737
        %741 = vset.pattern.permute.xlu0 0
        %742 = vperm.xlu0 %741, %v653
        %v743 = vpop.permute.xlu0 %742
        %746 = vset.pattern.permute.xlu0 0
        %747 = vperm.xlu0 %746, %v654
        %v748 = vpop.permute.xlu0 %747
        %v750 = vsub.f32 %v658, %v738
        %v751 = vsub.f32 %v662, %v738
        %v752 = vsub.f32 %v658, %v743
        %v753 = vsub.f32 %v662, %v743
        %v754 = vsub.f32 %v658, %v748
        %v755 = vsub.f32 %v662, %v748
        %v756 = vsub.f32 %v666, %v738
        %v757 = vsub.f32 %v670, %v738
        %v758 = vsub.f32 %v666, %v743
        %v759 = vsub.f32 %v670, %v743
        %v760 = vsub.f32 %v666, %v748
        %v761 = vsub.f32 %v670, %v748
        %v762 = vsub.f32 %v674, %v738
        %v763 = vsub.f32 %v678, %v738
        %v764 = vsub.f32 %v674, %v743
        %v765 = vsub.f32 %v678, %v743
        %v766 = vsub.f32 %v674, %v748
        %v767 = vsub.f32 %v678, %v748
        %v768 = vsub.f32 %v682, %v738
        %v769 = vsub.f32 %v686, %v738
        %v770 = vsub.f32 %v682, %v743
        %v771 = vsub.f32 %v686, %v743
        %v772 = vsub.f32 %v682, %v748
        %v773 = vsub.f32 %v686, %v748
        %v774 = vsub.f32 %v690, %v738
        %v775 = vsub.f32 %v694, %v738
        %v776 = vsub.f32 %v690, %v743
        %v777 = vsub.f32 %v694, %v743
        %v778 = vsub.f32 %v690, %v748
        %v779 = vsub.f32 %v694, %v748
        %v780 = vsub.f32 %v698, %v738
        %v781 = vsub.f32 %v702, %v738
        %v782 = vsub.f32 %v698, %v743
        %v783 = vsub.f32 %v702, %v743
        %v784 = vsub.f32 %v698, %v748
        %v785 = vsub.f32 %v702, %v748
        %v786 = vsub.f32 %v706, %v738
        %v787 = vsub.f32 %v710, %v738
        %v788 = vsub.f32 %v706, %v743
        %v789 = vsub.f32 %v710, %v743
        %v790 = vsub.f32 %v706, %v748
        %v791 = vsub.f32 %v710, %v748
        %v792 = vsub.f32 %v714, %v738
        %v793 = vsub.f32 %v718, %v738
        %v794 = vsub.f32 %v714, %v743
        %v795 = vsub.f32 %v718, %v743
        %v796 = vsub.f32 %v714, %v748
        %v797 = vsub.f32 %v718, %v748
        %v798 = vmul.f32 %v750, 0.15915494
        %v799 = vmul.f32 %v751, 0.15915494
        %v800 = vmul.f32 %v752, 0.15915494
        %v801 = vmul.f32 %v753, 0.15915494
        %v802 = vmul.f32 %v754, 0.15915494
        %v803 = vmul.f32 %v755, 0.15915494
        %v804 = vmul.f32 %v756, 0.15915494
        %v805 = vmul.f32 %v757, 0.15915494
        %v806 = vmul.f32 %v758, 0.15915494
        %v807 = vmul.f32 %v759, 0.15915494
        %v808 = vmul.f32 %v760, 0.15915494
        %v809 = vmul.f32 %v761, 0.15915494
        %v810 = vmul.f32 %v762, 0.15915494
        %v811 = vmul.f32 %v763, 0.15915494
        %v812 = vmul.f32 %v764, 0.15915494
        %v813 = vmul.f32 %v765, 0.15915494
        %v814 = vmul.f32 %v766, 0.15915494
        %v815 = vmul.f32 %v767, 0.15915494
        %v816 = vmul.f32 %v768, 0.15915494
        %v817 = vmul.f32 %v769, 0.15915494
        %v818 = vmul.f32 %v770, 0.15915494
        %v819 = vmul.f32 %v771, 0.15915494
        %v820 = vmul.f32 %v772, 0.15915494
        %v821 = vmul.f32 %v773, 0.15915494
        %v822 = vmul.f32 %v774, 0.15915494
        %v823 = vmul.f32 %v775, 0.15915494
        %v824 = vmul.f32 %v776, 0.15915494
        %v825 = vmul.f32 %v777, 0.15915494
        %v826 = vmul.f32 %v778, 0.15915494
        %v827 = vmul.f32 %v779, 0.15915494
        %v828 = vmul.f32 %v780, 0.15915494
        %v829 = vmul.f32 %v781, 0.15915494
        %v830 = vmul.f32 %v782, 0.15915494
        %v831 = vmul.f32 %v783, 0.15915494
        %v832 = vmul.f32 %v784, 0.15915494
        %v833 = vmul.f32 %v785, 0.15915494
        %v834 = vmul.f32 %v786, 0.15915494
        %v835 = vmul.f32 %v787, 0.15915494
        %v836 = vmul.f32 %v788, 0.15915494
        %v837 = vmul.f32 %v789, 0.15915494
        %v838 = vmul.f32 %v790, 0.15915494
        %v839 = vmul.f32 %v791, 0.15915494
        %v840 = vmul.f32 %v792, 0.15915494
        %v841 = vmul.f32 %v793, 0.15915494
        %v842 = vmul.f32 %v794, 0.15915494
        %v843 = vmul.f32 %v795, 0.15915494
        %v844 = vmul.f32 %v796, 0.15915494
        %v845 = vmul.f32 %v797, 0.15915494
        %v846 = vadd.f32 %v798, 0.5
        %v847 = vadd.f32 %v799, 0.5
        %v848 = vadd.f32 %v800, 0.5
        %v849 = vadd.f32 %v801, 0.5
        %v850 = vadd.f32 %v802, 0.5
        %v851 = vadd.f32 %v803, 0.5
        %v852 = vadd.f32 %v804, 0.5
        %v853 = vadd.f32 %v805, 0.5
        %v854 = vadd.f32 %v806, 0.5
        %v855 = vadd.f32 %v807, 0.5
        %v856 = vadd.f32 %v808, 0.5
        %v857 = vadd.f32 %v809, 0.5
        %v858 = vadd.f32 %v810, 0.5
        %v859 = vadd.f32 %v811, 0.5
        %v860 = vadd.f32 %v812, 0.5
        %v861 = vadd.f32 %v813, 0.5
        %v862 = vadd.f32 %v814, 0.5
        %v863 = vadd.f32 %v815, 0.5
        %v864 = vadd.f32 %v816, 0.5
        %v865 = vadd.f32 %v817, 0.5
        %v866 = vadd.f32 %v818, 0.5
        %v867 = vadd.f32 %v819, 0.5
        %v868 = vadd.f32 %v820, 0.5
        %v869 = vadd.f32 %v821, 0.5
        %v870 = vadd.f32 %v822, 0.5
        %v871 = vadd.f32 %v823, 0.5
        %v872 = vadd.f32 %v824, 0.5
        %v873 = vadd.f32 %v825, 0.5
        %v874 = vadd.f32 %v826, 0.5
        %v875 = vadd.f32 %v827, 0.5
        %v876 = vadd.f32 %v828, 0.5
        %v877 = vadd.f32 %v829, 0.5
        %v878 = vadd.f32 %v830, 0.5
        %v879 = vadd.f32 %v831, 0.5
        %v880 = vadd.f32 %v832, 0.5
        %v881 = vadd.f32 %v833, 0.5
        %v882 = vadd.f32 %v834, 0.5
        %v883 = vadd.f32 %v835, 0.5
        %v884 = vadd.f32 %v836, 0.5
        %v885 = vadd.f32 %v837, 0.5
        %v886 = vadd.f32 %v838, 0.5
        %v887 = vadd.f32 %v839, 0.5
        %v888 = vadd.f32 %v840, 0.5
        %v889 = vadd.f32 %v841, 0.5
        %v890 = vadd.f32 %v842, 0.5
        %v891 = vadd.f32 %v843, 0.5
        %v892 = vadd.f32 %v844, 0.5
        %v893 = vadd.f32 %v845, 0.5
        %v894 = vfloor.f32 %v846
        %v895 = vfloor.f32 %v847
        %v896 = vfloor.f32 %v848
        %v897 = vfloor.f32 %v849
        %v898 = vfloor.f32 %v850
        %v899 = vfloor.f32 %v851
        %v900 = vfloor.f32 %v852
        %v901 = vfloor.f32 %v853
        %v902 = vfloor.f32 %v854
        %v903 = vfloor.f32 %v855
        %v904 = vfloor.f32 %v856
        %v905 = vfloor.f32 %v857
        %v906 = vfloor.f32 %v858
        %v907 = vfloor.f32 %v859
        %v908 = vfloor.f32 %v860
        %v909 = vfloor.f32 %v861
        %v910 = vfloor.f32 %v862
        %v911 = vfloor.f32 %v863
        %v912 = vfloor.f32 %v864
        %v913 = vfloor.f32 %v865
        %v914 = vfloor.f32 %v866
        %v915 = vfloor.f32 %v867
        %v916 = vfloor.f32 %v868
        %v917 = vfloor.f32 %v869
        %v918 = vfloor.f32 %v870
        %v919 = vfloor.f32 %v871
        %v920 = vfloor.f32 %v872
        %v921 = vfloor.f32 %v873
        %v922 = vfloor.f32 %v874
        %v923 = vfloor.f32 %v875
        %v924 = vfloor.f32 %v876
        %v925 = vfloor.f32 %v877
        %v926 = vfloor.f32 %v878
        %v927 = vfloor.f32 %v879
        %v928 = vfloor.f32 %v880
        %v929 = vfloor.f32 %v881
        %v930 = vfloor.f32 %v882
        %v931 = vfloor.f32 %v883
        %v932 = vfloor.f32 %v884
        %v933 = vfloor.f32 %v885
        %v934 = vfloor.f32 %v886
        %v935 = vfloor.f32 %v887
        %v936 = vfloor.f32 %v888
        %v937 = vfloor.f32 %v889
        %v938 = vfloor.f32 %v890
        %v939 = vfloor.f32 %v891
        %v940 = vfloor.f32 %v892
        %v941 = vfloor.f32 %v893
        %v942 = vmul.f32 %v894, 6.2831855
        %v943 = vmul.f32 %v895, 6.2831855
        %v944 = vmul.f32 %v896, 6.2831855
        %v945 = vmul.f32 %v897, 6.2831855
        %v946 = vmul.f32 %v898, 6.2831855
        %v947 = vmul.f32 %v899, 6.2831855
        %v948 = vmul.f32 %v900, 6.2831855
        %v949 = vmul.f32 %v901, 6.2831855
        %v950 = vmul.f32 %v902, 6.2831855
        %v951 = vmul.f32 %v903, 6.2831855
        %v952 = vmul.f32 %v904, 6.2831855
        %v953 = vmul.f32 %v905, 6.2831855
        %v954 = vmul.f32 %v906, 6.2831855
        %v955 = vmul.f32 %v907, 6.2831855
        %v956 = vmul.f32 %v908, 6.2831855
        %v957 = vmul.f32 %v909, 6.2831855
        %v958 = vmul.f32 %v910, 6.2831855
        %v959 = vmul.f32 %v911, 6.2831855
        %v960 = vmul.f32 %v912, 6.2831855
        %v961 = vmul.f32 %v913, 6.2831855
        %v962 = vmul.f32 %v914, 6.2831855
        %v963 = vmul.f32 %v915, 6.2831855
        %v964 = vmul.f32 %v916, 6.2831855
        %v965 = vmul.f32 %v917, 6.2831855
        %v966 = vmul.f32 %v918, 6.2831855
        %v967 = vmul.f32 %v919, 6.2831855
        %v968 = vmul.f32 %v920, 6.2831855
        %v969 = vmul.f32 %v921, 6.2831855
        %v970 = vmul.f32 %v922, 6.2831855
        %v971 = vmul.f32 %v923, 6.2831855
        %v972 = vmul.f32 %v924, 6.2831855
        %v973 = vmul.f32 %v925, 6.2831855
        %v974 = vmul.f32 %v926, 6.2831855
        %v975 = vmul.f32 %v927, 6.2831855
        %v976 = vmul.f32 %v928, 6.2831855
        %v977 = vmul.f32 %v929, 6.2831855
        %v978 = vmul.f32 %v930, 6.2831855
        %v979 = vmul.f32 %v931, 6.2831855
        %v980 = vmul.f32 %v932, 6.2831855
        %v981 = vmul.f32 %v933, 6.2831855
        %v982 = vmul.f32 %v934, 6.2831855
        %v983 = vmul.f32 %v935, 6.2831855
        %v984 = vmul.f32 %v936, 6.2831855
        %v985 = vmul.f32 %v937, 6.2831855
        %v986 = vmul.f32 %v938, 6.2831855
        %v987 = vmul.f32 %v939, 6.2831855
        %v988 = vmul.f32 %v940, 6.2831855
        %v989 = vmul.f32 %v941, 6.2831855
        %v990 = vsub.f32 %v750, %v942
        %v991 = vsub.f32 %v751, %v943
        %v992 = vsub.f32 %v752, %v944
        %v993 = vsub.f32 %v753, %v945
        %v994 = vsub.f32 %v754, %v946
        %v995 = vsub.f32 %v755, %v947
        %v996 = vsub.f32 %v756, %v948
        %v997 = vsub.f32 %v757, %v949
        %v998 = vsub.f32 %v758, %v950
        %v999 = vsub.f32 %v759, %v951
        %v1000 = vsub.f32 %v760, %v952
        %v1001 = vsub.f32 %v761, %v953
        %v1002 = vsub.f32 %v762, %v954
        %v1003 = vsub.f32 %v763, %v955
        %v1004 = vsub.f32 %v764, %v956
        %v1005 = vsub.f32 %v765, %v957
        %v1006 = vsub.f32 %v766, %v958
        %v1007 = vsub.f32 %v767, %v959
        %v1008 = vsub.f32 %v768, %v960
        %v1009 = vsub.f32 %v769, %v961
        %v1010 = vsub.f32 %v770, %v962
        %v1011 = vsub.f32 %v771, %v963
        %v1012 = vsub.f32 %v772, %v964
        %v1013 = vsub.f32 %v773, %v965
        %v1014 = vsub.f32 %v774, %v966
        %v1015 = vsub.f32 %v775, %v967
        %v1016 = vsub.f32 %v776, %v968
        %v1017 = vsub.f32 %v777, %v969
        %v1018 = vsub.f32 %v778, %v970
        %v1019 = vsub.f32 %v779, %v971
        %v1020 = vsub.f32 %v780, %v972
        %v1021 = vsub.f32 %v781, %v973
        %v1022 = vsub.f32 %v782, %v974
        %v1023 = vsub.f32 %v783, %v975
        %v1024 = vsub.f32 %v784, %v976
        %v1025 = vsub.f32 %v785, %v977
        %v1026 = vsub.f32 %v786, %v978
        %v1027 = vsub.f32 %v787, %v979
        %v1028 = vsub.f32 %v788, %v980
        %v1029 = vsub.f32 %v789, %v981
        %v1030 = vsub.f32 %v790, %v982
        %v1031 = vsub.f32 %v791, %v983
        %v1032 = vsub.f32 %v792, %v984
        %v1033 = vsub.f32 %v793, %v985
        %v1034 = vsub.f32 %v794, %v986
        %v1035 = vsub.f32 %v795, %v987
        %v1036 = vsub.f32 %v796, %v988
        %v1037 = vsub.f32 %v797, %v989
        %v1038 = vmul.f32 %v990, %v990
        %v1039 = vmul.f32 %v991, %v991
        %v1040 = vmul.f32 %v992, %v992
        %v1041 = vmul.f32 %v993, %v993
        %v1042 = vmul.f32 %v994, %v994
        %v1043 = vmul.f32 %v995, %v995
        %v1044 = vmul.f32 %v996, %v996
        %v1045 = vmul.f32 %v997, %v997
        %v1046 = vmul.f32 %v998, %v998
        %v1047 = vmul.f32 %v999, %v999
        %v1048 = vmul.f32 %v1000, %v1000
        %v1049 = vmul.f32 %v1001, %v1001
        %v1050 = vmul.f32 %v1002, %v1002
        %v1051 = vmul.f32 %v1003, %v1003
        %v1052 = vmul.f32 %v1004, %v1004
        %v1053 = vmul.f32 %v1005, %v1005
        %v1054 = vmul.f32 %v1006, %v1006
        %v1055 = vmul.f32 %v1007, %v1007
        %v1056 = vmul.f32 %v1008, %v1008
        %v1057 = vmul.f32 %v1009, %v1009
        %v1058 = vmul.f32 %v1010, %v1010
        %v1059 = vmul.f32 %v1011, %v1011
        %v1060 = vmul.f32 %v1012, %v1012
        %v1061 = vmul.f32 %v1013, %v1013
        %v1062 = vmul.f32 %v1014, %v1014
        %v1063 = vmul.f32 %v1015, %v1015
        %v1064 = vmul.f32 %v1016, %v1016
        %v1065 = vmul.f32 %v1017, %v1017
        %v1066 = vmul.f32 %v1018, %v1018
        %v1067 = vmul.f32 %v1019, %v1019
        %v1068 = vmul.f32 %v1020, %v1020
        %v1069 = vmul.f32 %v1021, %v1021
        %v1070 = vmul.f32 %v1022, %v1022
        %v1071 = vmul.f32 %v1023, %v1023
        %v1072 = vmul.f32 %v1024, %v1024
        %v1073 = vmul.f32 %v1025, %v1025
        %v1074 = vmul.f32 %v1026, %v1026
        %v1075 = vmul.f32 %v1027, %v1027
        %v1076 = vmul.f32 %v1028, %v1028
        %v1077 = vmul.f32 %v1029, %v1029
        %v1078 = vmul.f32 %v1030, %v1030
        %v1079 = vmul.f32 %v1031, %v1031
        %v1080 = vmul.f32 %v1032, %v1032
        %v1081 = vmul.f32 %v1033, %v1033
        %v1082 = vmul.f32 %v1034, %v1034
        %v1083 = vmul.f32 %v1035, %v1035
        %v1084 = vmul.f32 %v1036, %v1036
        %v1085 = vmul.f32 %v1037, %v1037
        %v1086 = vmul.f32 %v1038, -50.0
        %v1087 = vmul.f32 %v1039, -50.0
        %v1088 = vmul.f32 %v1040, -50.0
        %v1089 = vmul.f32 %v1041, -50.0
        %v1090 = vmul.f32 %v1042, -50.0
        %v1091 = vmul.f32 %v1043, -50.0
        %v1092 = vmul.f32 %v1044, -50.0
        %v1093 = vmul.f32 %v1045, -50.0
        %v1094 = vmul.f32 %v1046, -50.0
        %v1095 = vmul.f32 %v1047, -50.0
        %v1096 = vmul.f32 %v1048, -50.0
        %v1097 = vmul.f32 %v1049, -50.0
        %v1098 = vmul.f32 %v1050, -50.0
        %v1099 = vmul.f32 %v1051, -50.0
        %v1100 = vmul.f32 %v1052, -50.0
        %v1101 = vmul.f32 %v1053, -50.0
        %v1102 = vmul.f32 %v1054, -50.0
        %v1103 = vmul.f32 %v1055, -50.0
        %v1104 = vmul.f32 %v1056, -50.0
        %v1105 = vmul.f32 %v1057, -50.0
        %v1106 = vmul.f32 %v1058, -50.0
        %v1107 = vmul.f32 %v1059, -50.0
        %v1108 = vmul.f32 %v1060, -50.0
        %v1109 = vmul.f32 %v1061, -50.0
        %v1110 = vmul.f32 %v1062, -50.0
        %v1111 = vmul.f32 %v1063, -50.0
        %v1112 = vmul.f32 %v1064, -50.0
        %v1113 = vmul.f32 %v1065, -50.0
        %v1114 = vmul.f32 %v1066, -50.0
        %v1115 = vmul.f32 %v1067, -50.0
        %v1116 = vmul.f32 %v1068, -50.0
        %v1117 = vmul.f32 %v1069, -50.0
        %v1118 = vmul.f32 %v1070, -50.0
        %v1119 = vmul.f32 %v1071, -50.0
        %v1120 = vmul.f32 %v1072, -50.0
        %v1121 = vmul.f32 %v1073, -50.0
        %v1122 = vmul.f32 %v1074, -50.0
        %v1123 = vmul.f32 %v1075, -50.0
        %v1124 = vmul.f32 %v1076, -50.0
        %v1125 = vmul.f32 %v1077, -50.0
        %v1126 = vmul.f32 %v1078, -50.0
        %v1127 = vmul.f32 %v1079, -50.0
        %v1128 = vmul.f32 %v1080, -50.0
        %v1129 = vmul.f32 %v1081, -50.0
        %v1130 = vmul.f32 %v1082, -50.0
        %v1131 = vmul.f32 %v1083, -50.0
        %v1132 = vmul.f32 %v1084, -50.0
        %v1133 = vmul.f32 %v1085, -50.0
        %v1134 = vmul.f32 %v1086, 1.442695
        %v1135 = vpow.pop %v1134
        %v1136 = vmul.f32 %v1087, 1.442695
        %v1137 = vpow.pop %v1136
        %v1138 = vmul.f32 %v1088, 1.442695
        %v1139 = vpow.pop %v1138
        %v1140 = vmul.f32 %v1089, 1.442695
        %v1141 = vpow.pop %v1140
        %v1142 = vmul.f32 %v1090, 1.442695
        %v1143 = vpow.pop %v1142
        %v1144 = vmul.f32 %v1091, 1.442695
        %v1145 = vpow.pop %v1144
        %v1146 = vmul.f32 %v1092, 1.442695
        %v1147 = vpow.pop %v1146
        %v1148 = vmul.f32 %v1093, 1.442695
        %v1149 = vpow.pop %v1148
        %v1150 = vmul.f32 %v1094, 1.442695
        %v1151 = vpow.pop %v1150
        %v1152 = vmul.f32 %v1095, 1.442695
        %v1153 = vpow.pop %v1152
        %v1154 = vmul.f32 %v1096, 1.442695
        %v1155 = vpow.pop %v1154
        %v1156 = vmul.f32 %v1097, 1.442695
        %v1157 = vpow.pop %v1156
        %v1158 = vmul.f32 %v1098, 1.442695
        %v1159 = vpow.pop %v1158
        %v1160 = vmul.f32 %v1099, 1.442695
        %v1161 = vpow.pop %v1160
        %v1162 = vmul.f32 %v1100, 1.442695
        %v1163 = vpow.pop %v1162
        %v1164 = vmul.f32 %v1101, 1.442695
        %v1165 = vpow.pop %v1164
        %v1166 = vmul.f32 %v1102, 1.442695
        %v1167 = vpow.pop %v1166
        %v1168 = vmul.f32 %v1103, 1.442695
        %v1169 = vpow.pop %v1168
        %v1170 = vmul.f32 %v1104, 1.442695
        %v1171 = vpow.pop %v1170
        %v1172 = vmul.f32 %v1105, 1.442695
        %v1173 = vpow.pop %v1172
        %v1174 = vmul.f32 %v1106, 1.442695
        %v1175 = vpow.pop %v1174
        %v1176 = vmul.f32 %v1107, 1.442695
        %v1177 = vpow.pop %v1176
        %v1178 = vmul.f32 %v1108, 1.442695
        %v1179 = vpow.pop %v1178
        %v1180 = vmul.f32 %v1109, 1.442695
        %v1181 = vpow.pop %v1180
        %v1182 = vmul.f32 %v1110, 1.442695
        %v1183 = vpow.pop %v1182
        %v1184 = vmul.f32 %v1111, 1.442695
        %v1185 = vpow.pop %v1184
        %v1186 = vmul.f32 %v1112, 1.442695
        %v1187 = vpow.pop %v1186
        %v1188 = vmul.f32 %v1113, 1.442695
        %v1189 = vpow.pop %v1188
        %v1190 = vmul.f32 %v1114, 1.442695
        %v1191 = vpow.pop %v1190
        %v1192 = vmul.f32 %v1115, 1.442695
        %v1193 = vpow.pop %v1192
        %v1194 = vmul.f32 %v1116, 1.442695
        %v1195 = vpow.pop %v1194
        %v1196 = vmul.f32 %v1117, 1.442695
        %v1197 = vpow.pop %v1196
        %v1198 = vmul.f32 %v1118, 1.442695
        %v1199 = vpow.pop %v1198
        %v1200 = vmul.f32 %v1119, 1.442695
        %v1201 = vpow.pop %v1200
        %v1202 = vmul.f32 %v1120, 1.442695
        %v1203 = vpow.pop %v1202
        %v1204 = vmul.f32 %v1121, 1.442695
        %v1205 = vpow.pop %v1204
        %v1206 = vmul.f32 %v1122, 1.442695
        %v1207 = vpow.pop %v1206
        %v1208 = vmul.f32 %v1123, 1.442695
        %v1209 = vpow.pop %v1208
        %v1210 = vmul.f32 %v1124, 1.442695
        %v1211 = vpow.pop %v1210
        %v1212 = vmul.f32 %v1125, 1.442695
        %v1213 = vpow.pop %v1212
        %v1214 = vmul.f32 %v1126, 1.442695
        %v1215 = vpow.pop %v1214
        %v1216 = vmul.f32 %v1127, 1.442695
        %v1217 = vpow.pop %v1216
        %v1218 = vmul.f32 %v1128, 1.442695
        %v1219 = vpow.pop %v1218
        %v1220 = vmul.f32 %v1129, 1.442695
        %v1221 = vpow.pop %v1220
        %v1222 = vmul.f32 %v1130, 1.442695
        %v1223 = vpow.pop %v1222
        %v1224 = vmul.f32 %v1131, 1.442695
        %v1225 = vpow.pop %v1224
        %v1226 = vmul.f32 %v1132, 1.442695
        %v1227 = vpow.pop %v1226
        %v1228 = vmul.f32 %v1133, 1.442695
        %v1229 = vpow.pop %v1228
        %v1230 = vlaneseq
        %v1231 = vshrl.u32 %v1230, 7
        %v1232 = vsub.s32 0, %v1231
        %v1233 = vrot.slane %v466, %v1232
        %v1234 = vlaneseq
        %v1235 = vshrl.u32 %v1234, 7
        %v1236 = vsub.s32 1, %v1235
        %v1237 = vrot.slane %v466, %v1236
        %v1238 = vlaneseq
        %v1239 = vshrl.u32 %v1238, 7
        %v1240 = vsub.s32 0, %v1239
        %v1241 = vrot.slane %v480, %v1240
        %v1242 = vlaneseq
        %v1243 = vshrl.u32 %v1242, 7
        %v1244 = vsub.s32 1, %v1243
        %v1245 = vrot.slane %v480, %v1244
        %v1246 = vlaneseq
        %v1247 = vshrl.u32 %v1246, 7
        %v1248 = vsub.s32 0, %v1247
        %v1249 = vrot.slane %v488, %v1248
        %v1250 = vlaneseq
        %v1251 = vshrl.u32 %v1250, 7
        %v1252 = vsub.s32 1, %v1251
        %v1253 = vrot.slane %v488, %v1252
        %v1254 = vlaneseq
        %v1255 = vshrl.u32 %v1254, 7
        %v1256 = vsub.s32 0, %v1255
        %v1257 = vrot.slane %v490, %v1256
        %v1258 = vlaneseq
        %v1259 = vshrl.u32 %v1258, 7
        %v1260 = vsub.s32 1, %v1259
        %v1261 = vrot.slane %v490, %v1260
        %v1262 = vlaneseq
        %v1263 = vshrl.u32 %v1262, 7
        %v1264 = vsub.s32 0, %v1263
        %v1265 = vrot.slane %v473, %v1264
        %v1266 = vlaneseq
        %v1267 = vshrl.u32 %v1266, 7
        %v1268 = vsub.s32 1, %v1267
        %v1269 = vrot.slane %v473, %v1268
        %v1270 = vlaneseq
        %v1271 = vshrl.u32 %v1270, 7
        %v1272 = vsub.s32 0, %v1271
        %v1273 = vrot.slane %v487, %v1272
        %v1274 = vlaneseq
        %v1275 = vshrl.u32 %v1274, 7
        %v1276 = vsub.s32 1, %v1275
        %v1277 = vrot.slane %v487, %v1276
        %v1278 = vlaneseq
        %v1279 = vshrl.u32 %v1278, 7
        %v1280 = vsub.s32 0, %v1279
        %v1281 = vrot.slane %v489, %v1280
        %v1282 = vlaneseq
        %v1283 = vshrl.u32 %v1282, 7
        %v1284 = vsub.s32 1, %v1283
        %v1285 = vrot.slane %v489, %v1284
        %v1286 = vlaneseq
        %v1287 = vshrl.u32 %v1286, 7
        %v1288 = vsub.s32 0, %v1287
        %v1289 = vrot.slane %v491, %v1288
        %v1290 = vlaneseq
        %v1291 = vshrl.u32 %v1290, 7
        %v1292 = vsub.s32 1, %v1291
        %v1293 = vrot.slane %v491, %v1292
        %v1310 = vmul.f32 %v1233, %v1135
        %v1311 = vmul.f32 %v1237, %v1137
        %v1312 = vmul.f32 %v1233, %v1139
        %v1313 = vmul.f32 %v1237, %v1141
        %v1314 = vmul.f32 %v1233, %v1143
        %v1315 = vmul.f32 %v1237, %v1145
        %v1316 = vmul.f32 %v1241, %v1147
        %v1317 = vmul.f32 %v1245, %v1149
        %v1318 = vmul.f32 %v1241, %v1151
        %v1319 = vmul.f32 %v1245, %v1153
        %v1320 = vmul.f32 %v1241, %v1155
        %v1321 = vmul.f32 %v1245, %v1157
        %v1322 = vmul.f32 %v1249, %v1159
        %v1323 = vmul.f32 %v1253, %v1161
        %v1324 = vmul.f32 %v1249, %v1163
        %v1325 = vmul.f32 %v1253, %v1165
        %v1326 = vmul.f32 %v1249, %v1167
        %v1327 = vmul.f32 %v1253, %v1169
        %v1328 = vmul.f32 %v1257, %v1171
        %v1329 = vmul.f32 %v1261, %v1173
        %v1330 = vmul.f32 %v1257, %v1175
        %v1331 = vmul.f32 %v1261, %v1177
        %v1332 = vmul.f32 %v1257, %v1179
        %v1333 = vmul.f32 %v1261, %v1181
        %v1334 = vmul.f32 %v1265, %v1183
        %v1335 = vmul.f32 %v1269, %v1185
        %v1336 = vmul.f32 %v1265, %v1187
        %v1337 = vmul.f32 %v1269, %v1189
        %v1338 = vmul.f32 %v1265, %v1191
        %v1339 = vmul.f32 %v1269, %v1193
        %v1340 = vmul.f32 %v1273, %v1195
        %v1341 = vmul.f32 %v1277, %v1197
        %v1342 = vmul.f32 %v1273, %v1199
        %v1343 = vmul.f32 %v1277, %v1201
        %v1344 = vmul.f32 %v1273, %v1203
        %v1345 = vmul.f32 %v1277, %v1205
        %v1346 = vmul.f32 %v1281, %v1207
        %v1347 = vmul.f32 %v1285, %v1209
        %v1348 = vmul.f32 %v1281, %v1211
        %v1349 = vmul.f32 %v1285, %v1213
        %v1350 = vmul.f32 %v1281, %v1215
        %v1351 = vmul.f32 %v1285, %v1217
        %v1352 = vmul.f32 %v1289, %v1219
        %v1353 = vmul.f32 %v1293, %v1221
        %v1354 = vmul.f32 %v1289, %v1223
        %v1355 = vmul.f32 %v1293, %v1225
        %v1356 = vmul.f32 %v1289, %v1227
        %v1357 = vmul.f32 %v1293, %v1229
        %v1358 = vadd.f32 %v1310, %v1311
        %1359 = vadd.xlane.f32.xlu0 %v1358
        %v1360 = vpop.xlane.xlu0 %1359
        %v1361 = vadd.f32 %v1312, %v1313
        %1362 = vadd.xlane.f32.xlu0 %v1361
        %v1363 = vpop.xlane.xlu0 %1362
        %v1364 = vadd.f32 %v1314, %v1315
        %1365 = vadd.xlane.f32.xlu0 %v1364
        %v1366 = vpop.xlane.xlu0 %1365
        %v1367 = vadd.f32 %v1316, %v1317
        %1368 = vadd.xlane.f32.xlu0 %v1367
        %v1369 = vpop.xlane.xlu0 %1368
        %v1370 = vadd.f32 %v1318, %v1319
        %1371 = vadd.xlane.f32.xlu0 %v1370
        %v1372 = vpop.xlane.xlu0 %1371
        %v1373 = vadd.f32 %v1320, %v1321
        %1374 = vadd.xlane.f32.xlu0 %v1373
        %v1375 = vpop.xlane.xlu0 %1374
        %v1376 = vadd.f32 %v1322, %v1323
        %1377 = vadd.xlane.f32.xlu0 %v1376
        %v1378 = vpop.xlane.xlu0 %1377
        %v1379 = vadd.f32 %v1324, %v1325
        %1380 = vadd.xlane.f32.xlu0 %v1379
        %v1381 = vpop.xlane.xlu0 %1380
        %v1382 = vadd.f32 %v1326, %v1327
        %1383 = vadd.xlane.f32.xlu0 %v1382
        %v1384 = vpop.xlane.xlu0 %1383
        %v1385 = vadd.f32 %v1328, %v1329
        %1386 = vadd.xlane.f32.xlu0 %v1385
        %v1387 = vpop.xlane.xlu0 %1386
        %v1388 = vadd.f32 %v1330, %v1331
        %1389 = vadd.xlane.f32.xlu0 %v1388
        %v1390 = vpop.xlane.xlu0 %1389
        %v1391 = vadd.f32 %v1332, %v1333
        %1392 = vadd.xlane.f32.xlu0 %v1391
        %v1393 = vpop.xlane.xlu0 %1392
        %v1394 = vadd.f32 %v1334, %v1335
        %1395 = vadd.xlane.f32.xlu0 %v1394
        %v1396 = vpop.xlane.xlu0 %1395
        %v1397 = vadd.f32 %v1336, %v1337
        %1398 = vadd.xlane.f32.xlu0 %v1397
        %v1399 = vpop.xlane.xlu0 %1398
        %v1400 = vadd.f32 %v1338, %v1339
        %1401 = vadd.xlane.f32.xlu0 %v1400
        %v1402 = vpop.xlane.xlu0 %1401
        %v1403 = vadd.f32 %v1340, %v1341
        %1404 = vadd.xlane.f32.xlu0 %v1403
        %v1405 = vpop.xlane.xlu0 %1404
        %v1406 = vadd.f32 %v1342, %v1343
        %1407 = vadd.xlane.f32.xlu0 %v1406
        %v1408 = vpop.xlane.xlu0 %1407
        %v1409 = vadd.f32 %v1344, %v1345
        %1410 = vadd.xlane.f32.xlu0 %v1409
        %v1411 = vpop.xlane.xlu0 %1410
        %v1412 = vadd.f32 %v1346, %v1347
        %1413 = vadd.xlane.f32.xlu0 %v1412
        %v1414 = vpop.xlane.xlu0 %1413
        %v1415 = vadd.f32 %v1348, %v1349
        %1416 = vadd.xlane.f32.xlu0 %v1415
        %v1417 = vpop.xlane.xlu0 %1416
        %v1418 = vadd.f32 %v1350, %v1351
        %1419 = vadd.xlane.f32.xlu0 %v1418
        %v1420 = vpop.xlane.xlu0 %1419
        %v1421 = vadd.f32 %v1352, %v1353
        %1422 = vadd.xlane.f32.xlu0 %v1421
        %v1423 = vpop.xlane.xlu0 %1422
        %v1424 = vadd.f32 %v1354, %v1355
        %1425 = vadd.xlane.f32.xlu0 %v1424
        %v1426 = vpop.xlane.xlu0 %1425
        %v1427 = vadd.f32 %v1356, %v1357
        %1428 = vadd.xlane.f32.xlu0 %v1427
        %v1429 = vpop.xlane.xlu0 %1428
        %v1430 = vmul.f32 %v1360, 7.9788456
        %v1431 = vmul.f32 %v1363, 7.9788456
        %v1432 = vmul.f32 %v1366, 7.9788456
        %v1433 = vmul.f32 %v1369, 7.9788456
        %v1434 = vmul.f32 %v1372, 7.9788456
        %v1435 = vmul.f32 %v1375, 7.9788456
        %v1436 = vmul.f32 %v1378, 7.9788456
        %v1437 = vmul.f32 %v1381, 7.9788456
        %v1438 = vmul.f32 %v1384, 7.9788456
        %v1439 = vmul.f32 %v1387, 7.9788456
        %v1440 = vmul.f32 %v1390, 7.9788456
        %v1441 = vmul.f32 %v1393, 7.9788456
        %v1442 = vmul.f32 %v1396, 7.9788456
        %v1443 = vmul.f32 %v1399, 7.9788456
        %v1444 = vmul.f32 %v1402, 7.9788456
        %v1445 = vmul.f32 %v1405, 7.9788456
        %v1446 = vmul.f32 %v1408, 7.9788456
        %v1447 = vmul.f32 %v1411, 7.9788456
        %v1448 = vmul.f32 %v1414, 7.9788456
        %v1449 = vmul.f32 %v1417, 7.9788456
        %v1450 = vmul.f32 %v1420, 7.9788456
        %v1451 = vmul.f32 %v1423, 7.9788456
        %v1452 = vmul.f32 %v1426, 7.9788456
        %v1453 = vmul.f32 %v1429, 7.9788456
        %v1454 = vrsqrt.pop %v1430
        %v1455 = vmul.f32 %v1430, %v1454
        %vm1456 = vcmp.eq.f32.partialorder %v1430, inf
        %v1457 = vsel %vm1456, %v1430, %v1455
        %vm1458 = vcmp.eq.f32.partialorder %v1430, 0.0
        %v1459 = vand.u32 %v1430, 2147483648
        %v1460 = vsel %vm1458, %v1459, %v1457
        %v1461 = vrsqrt.pop %v1431
        %v1462 = vmul.f32 %v1431, %v1461
        %vm1463 = vcmp.eq.f32.partialorder %v1431, inf
        %v1464 = vsel %vm1463, %v1431, %v1462
        %vm1465 = vcmp.eq.f32.partialorder %v1431, 0.0
        %v1466 = vand.u32 %v1431, 2147483648
        %v1467 = vsel %vm1465, %v1466, %v1464
        %v1468 = vrsqrt.pop %v1432
        %v1469 = vmul.f32 %v1432, %v1468
        %vm1470 = vcmp.eq.f32.partialorder %v1432, inf
        %v1471 = vsel %vm1470, %v1432, %v1469
        %vm1472 = vcmp.eq.f32.partialorder %v1432, 0.0
        %v1473 = vand.u32 %v1432, 2147483648
        %v1474 = vsel %vm1472, %v1473, %v1471
        %v1475 = vrsqrt.pop %v1433
        %v1476 = vmul.f32 %v1433, %v1475
        %vm1477 = vcmp.eq.f32.partialorder %v1433, inf
        %v1478 = vsel %vm1477, %v1433, %v1476
        %vm1479 = vcmp.eq.f32.partialorder %v1433, 0.0
        %v1480 = vand.u32 %v1433, 2147483648
        %v1481 = vsel %vm1479, %v1480, %v1478
        %v1482 = vrsqrt.pop %v1434
        %v1483 = vmul.f32 %v1434, %v1482
        %vm1484 = vcmp.eq.f32.partialorder %v1434, inf
        %v1485 = vsel %vm1484, %v1434, %v1483
        %vm1486 = vcmp.eq.f32.partialorder %v1434, 0.0
        %v1487 = vand.u32 %v1434, 2147483648
        %v1488 = vsel %vm1486, %v1487, %v1485
        %v1489 = vrsqrt.pop %v1435
        %v1490 = vmul.f32 %v1435, %v1489
        %vm1491 = vcmp.eq.f32.partialorder %v1435, inf
        %v1492 = vsel %vm1491, %v1435, %v1490
        %vm1493 = vcmp.eq.f32.partialorder %v1435, 0.0
        %v1494 = vand.u32 %v1435, 2147483648
        %v1495 = vsel %vm1493, %v1494, %v1492
        %v1496 = vrsqrt.pop %v1436
        %v1497 = vmul.f32 %v1436, %v1496
        %vm1498 = vcmp.eq.f32.partialorder %v1436, inf
        %v1499 = vsel %vm1498, %v1436, %v1497
        %vm1500 = vcmp.eq.f32.partialorder %v1436, 0.0
        %v1501 = vand.u32 %v1436, 2147483648
        %v1502 = vsel %vm1500, %v1501, %v1499
        %v1503 = vrsqrt.pop %v1437
        %v1504 = vmul.f32 %v1437, %v1503
        %vm1505 = vcmp.eq.f32.partialorder %v1437, inf
        %v1506 = vsel %vm1505, %v1437, %v1504
        %vm1507 = vcmp.eq.f32.partialorder %v1437, 0.0
        %v1508 = vand.u32 %v1437, 2147483648
        %v1509 = vsel %vm1507, %v1508, %v1506
        %v1510 = vrsqrt.pop %v1438
        %v1511 = vmul.f32 %v1438, %v1510
        %vm1512 = vcmp.eq.f32.partialorder %v1438, inf
        %v1513 = vsel %vm1512, %v1438, %v1511
        %vm1514 = vcmp.eq.f32.partialorder %v1438, 0.0
        %v1515 = vand.u32 %v1438, 2147483648
        %v1516 = vsel %vm1514, %v1515, %v1513
        %v1517 = vrsqrt.pop %v1439
        %v1518 = vmul.f32 %v1439, %v1517
        %vm1519 = vcmp.eq.f32.partialorder %v1439, inf
        %v1520 = vsel %vm1519, %v1439, %v1518
        %vm1521 = vcmp.eq.f32.partialorder %v1439, 0.0
        %v1522 = vand.u32 %v1439, 2147483648
        %v1523 = vsel %vm1521, %v1522, %v1520
        %v1524 = vrsqrt.pop %v1440
        %v1525 = vmul.f32 %v1440, %v1524
        %vm1526 = vcmp.eq.f32.partialorder %v1440, inf
        %v1527 = vsel %vm1526, %v1440, %v1525
        %vm1528 = vcmp.eq.f32.partialorder %v1440, 0.0
        %v1529 = vand.u32 %v1440, 2147483648
        %v1530 = vsel %vm1528, %v1529, %v1527
        %v1531 = vrsqrt.pop %v1441
        %v1532 = vmul.f32 %v1441, %v1531
        %vm1533 = vcmp.eq.f32.partialorder %v1441, inf
        %v1534 = vsel %vm1533, %v1441, %v1532
        %vm1535 = vcmp.eq.f32.partialorder %v1441, 0.0
        %v1536 = vand.u32 %v1441, 2147483648
        %v1537 = vsel %vm1535, %v1536, %v1534
        %v1538 = vrsqrt.pop %v1442
        %v1539 = vmul.f32 %v1442, %v1538
        %vm1540 = vcmp.eq.f32.partialorder %v1442, inf
        %v1541 = vsel %vm1540, %v1442, %v1539
        %vm1542 = vcmp.eq.f32.partialorder %v1442, 0.0
        %v1543 = vand.u32 %v1442, 2147483648
        %v1544 = vsel %vm1542, %v1543, %v1541
        %v1545 = vrsqrt.pop %v1443
        %v1546 = vmul.f32 %v1443, %v1545
        %vm1547 = vcmp.eq.f32.partialorder %v1443, inf
        %v1548 = vsel %vm1547, %v1443, %v1546
        %vm1549 = vcmp.eq.f32.partialorder %v1443, 0.0
        %v1550 = vand.u32 %v1443, 2147483648
        %v1551 = vsel %vm1549, %v1550, %v1548
        %v1552 = vrsqrt.pop %v1444
        %v1553 = vmul.f32 %v1444, %v1552
        %vm1554 = vcmp.eq.f32.partialorder %v1444, inf
        %v1555 = vsel %vm1554, %v1444, %v1553
        %vm1556 = vcmp.eq.f32.partialorder %v1444, 0.0
        %v1557 = vand.u32 %v1444, 2147483648
        %v1558 = vsel %vm1556, %v1557, %v1555
        %v1559 = vrsqrt.pop %v1445
        %v1560 = vmul.f32 %v1445, %v1559
        %vm1561 = vcmp.eq.f32.partialorder %v1445, inf
        %v1562 = vsel %vm1561, %v1445, %v1560
        %vm1563 = vcmp.eq.f32.partialorder %v1445, 0.0
        %v1564 = vand.u32 %v1445, 2147483648
        %v1565 = vsel %vm1563, %v1564, %v1562
        %v1566 = vrsqrt.pop %v1446
        %v1567 = vmul.f32 %v1446, %v1566
        %vm1568 = vcmp.eq.f32.partialorder %v1446, inf
        %v1569 = vsel %vm1568, %v1446, %v1567
        %vm1570 = vcmp.eq.f32.partialorder %v1446, 0.0
        %v1571 = vand.u32 %v1446, 2147483648
        %v1572 = vsel %vm1570, %v1571, %v1569
        %v1573 = vrsqrt.pop %v1447
        %v1574 = vmul.f32 %v1447, %v1573
        %vm1575 = vcmp.eq.f32.partialorder %v1447, inf
        %v1576 = vsel %vm1575, %v1447, %v1574
        %vm1577 = vcmp.eq.f32.partialorder %v1447, 0.0
        %v1578 = vand.u32 %v1447, 2147483648
        %v1579 = vsel %vm1577, %v1578, %v1576
        %v1580 = vrsqrt.pop %v1448
        %v1581 = vmul.f32 %v1448, %v1580
        %vm1582 = vcmp.eq.f32.partialorder %v1448, inf
        %v1583 = vsel %vm1582, %v1448, %v1581
        %vm1584 = vcmp.eq.f32.partialorder %v1448, 0.0
        %v1585 = vand.u32 %v1448, 2147483648
        %v1586 = vsel %vm1584, %v1585, %v1583
        %v1587 = vrsqrt.pop %v1449
        %v1588 = vmul.f32 %v1449, %v1587
        %vm1589 = vcmp.eq.f32.partialorder %v1449, inf
        %v1590 = vsel %vm1589, %v1449, %v1588
        %vm1591 = vcmp.eq.f32.partialorder %v1449, 0.0
        %v1592 = vand.u32 %v1449, 2147483648
        %v1593 = vsel %vm1591, %v1592, %v1590
        %v1594 = vrsqrt.pop %v1450
        %v1595 = vmul.f32 %v1450, %v1594
        %vm1596 = vcmp.eq.f32.partialorder %v1450, inf
        %v1597 = vsel %vm1596, %v1450, %v1595
        %vm1598 = vcmp.eq.f32.partialorder %v1450, 0.0
        %v1599 = vand.u32 %v1450, 2147483648
        %v1600 = vsel %vm1598, %v1599, %v1597
        %v1601 = vrsqrt.pop %v1451
        %v1602 = vmul.f32 %v1451, %v1601
        %vm1603 = vcmp.eq.f32.partialorder %v1451, inf
        %v1604 = vsel %vm1603, %v1451, %v1602
        %vm1605 = vcmp.eq.f32.partialorder %v1451, 0.0
        %v1606 = vand.u32 %v1451, 2147483648
        %v1607 = vsel %vm1605, %v1606, %v1604
        %v1608 = vrsqrt.pop %v1452
        %v1609 = vmul.f32 %v1452, %v1608
        %vm1610 = vcmp.eq.f32.partialorder %v1452, inf
        %v1611 = vsel %vm1610, %v1452, %v1609
        %vm1612 = vcmp.eq.f32.partialorder %v1452, 0.0
        %v1613 = vand.u32 %v1452, 2147483648
        %v1614 = vsel %vm1612, %v1613, %v1611
        %v1615 = vrsqrt.pop %v1453
        %v1616 = vmul.f32 %v1453, %v1615
        %vm1617 = vcmp.eq.f32.partialorder %v1453, inf
        %v1618 = vsel %vm1617, %v1453, %v1616
        %vm1619 = vcmp.eq.f32.partialorder %v1453, 0.0
        %v1620 = vand.u32 %v1453, 2147483648
        %v1621 = vsel %vm1619, %v1620, %v1618
        %v1646 = vlaneseq
        %v1647 = vand.u32 %v1646, 127
        %v1648 = vlaneseq
        %v1649 = vshrl.u32 %v1648, 7
        %v1650 = vsub.s32 %v1647, %v1649
        %v1651 = vrot.slane %v1460, %v1650
        %v1652 = vadd.s32 %v1647, 4294967288
        %v1653 = vlaneseq
        %v1654 = vshrl.u32 %v1653, 7
        %v1655 = vsub.s32 %v1652, %v1654
        %v1656 = vrot.slane %v1467, %v1655
        %vm1657 = vcmask 130112
        %v1658 = vsel %vm1657, %v1656, %v1651
        %v1659 = vadd.s32 %v1647, 4294967280
        %v1660 = vlaneseq
        %v1661 = vshrl.u32 %v1660, 7
        %v1662 = vsub.s32 %v1659, %v1661
        %v1663 = vrot.slane %v1474, %v1662
        %vm1664 = vcmask 195712
        %v1665 = vsel %vm1664, %v1663, %v1658
        %v1666 = vlaneseq
        %v1667 = vshrl.u32 %v1666, 7
        %v1668 = vsub.s32 %v1647, %v1667
        %v1669 = vrot.slane %v1481, %v1668
        %v1670 = vlaneseq
        %v1671 = vshrl.u32 %v1670, 7
        %v1672 = vsub.s32 %v1652, %v1671
        %v1673 = vrot.slane %v1488, %v1672
        %v1674 = vsel %vm1657, %v1673, %v1669
        %v1675 = vlaneseq
        %v1676 = vshrl.u32 %v1675, 7
        %v1677 = vsub.s32 %v1659, %v1676
        %v1678 = vrot.slane %v1495, %v1677
        %v1679 = vsel %vm1664, %v1678, %v1674
        %v1680 = vlaneseq
        %v1681 = vshrl.u32 %v1680, 7
        %v1682 = vsub.s32 %v1647, %v1681
        %v1683 = vrot.slane %v1502, %v1682
        %v1684 = vlaneseq
        %v1685 = vshrl.u32 %v1684, 7
        %v1686 = vsub.s32 %v1652, %v1685
        %v1687 = vrot.slane %v1509, %v1686
        %v1688 = vsel %vm1657, %v1687, %v1683
        %v1689 = vlaneseq
        %v1690 = vshrl.u32 %v1689, 7
        %v1691 = vsub.s32 %v1659, %v1690
        %v1692 = vrot.slane %v1516, %v1691
        %v1693 = vsel %vm1664, %v1692, %v1688
        %v1694 = vlaneseq
        %v1695 = vshrl.u32 %v1694, 7
        %v1696 = vsub.s32 %v1647, %v1695
        %v1697 = vrot.slane %v1523, %v1696
        %v1698 = vlaneseq
        %v1699 = vshrl.u32 %v1698, 7
        %v1700 = vsub.s32 %v1652, %v1699
        %v1701 = vrot.slane %v1530, %v1700
        %v1702 = vsel %vm1657, %v1701, %v1697
        %v1703 = vlaneseq
        %v1704 = vshrl.u32 %v1703, 7
        %v1705 = vsub.s32 %v1659, %v1704
        %v1706 = vrot.slane %v1537, %v1705
        %v1707 = vsel %vm1664, %v1706, %v1702
        %v1708 = vlaneseq
        %v1709 = vshrl.u32 %v1708, 7
        %v1710 = vsub.s32 %v1647, %v1709
        %v1711 = vrot.slane %v1544, %v1710
        %v1712 = vlaneseq
        %v1713 = vshrl.u32 %v1712, 7
        %v1714 = vsub.s32 %v1652, %v1713
        %v1715 = vrot.slane %v1551, %v1714
        %v1716 = vsel %vm1657, %v1715, %v1711
        %v1717 = vlaneseq
        %v1718 = vshrl.u32 %v1717, 7
        %v1719 = vsub.s32 %v1659, %v1718
        %v1720 = vrot.slane %v1558, %v1719
        %v1721 = vsel %vm1664, %v1720, %v1716
        %v1722 = vlaneseq
        %v1723 = vshrl.u32 %v1722, 7
        %v1724 = vsub.s32 %v1647, %v1723
        %v1725 = vrot.slane %v1565, %v1724
        %v1726 = vlaneseq
        %v1727 = vshrl.u32 %v1726, 7
        %v1728 = vsub.s32 %v1652, %v1727
        %v1729 = vrot.slane %v1572, %v1728
        %v1730 = vsel %vm1657, %v1729, %v1725
        %v1731 = vlaneseq
        %v1732 = vshrl.u32 %v1731, 7
        %v1733 = vsub.s32 %v1659, %v1732
        %v1734 = vrot.slane %v1579, %v1733
        %v1735 = vsel %vm1664, %v1734, %v1730
        %v1736 = vlaneseq
        %v1737 = vshrl.u32 %v1736, 7
        %v1738 = vsub.s32 %v1647, %v1737
        %v1739 = vrot.slane %v1586, %v1738
        %v1740 = vlaneseq
        %v1741 = vshrl.u32 %v1740, 7
        %v1742 = vsub.s32 %v1652, %v1741
        %v1743 = vrot.slane %v1593, %v1742
        %v1744 = vsel %vm1657, %v1743, %v1739
        %v1745 = vlaneseq
        %v1746 = vshrl.u32 %v1745, 7
        %v1747 = vsub.s32 %v1659, %v1746
        %v1748 = vrot.slane %v1600, %v1747
        %v1749 = vsel %vm1664, %v1748, %v1744
        %v1750 = vlaneseq
        %v1751 = vshrl.u32 %v1750, 7
        %v1752 = vsub.s32 %v1647, %v1751
        %v1753 = vrot.slane %v1607, %v1752
        %v1754 = vlaneseq
        %v1755 = vshrl.u32 %v1754, 7
        %v1756 = vsub.s32 %v1652, %v1755
        %v1757 = vrot.slane %v1614, %v1756
        %v1758 = vsel %vm1657, %v1757, %v1753
        %v1759 = vlaneseq
        %v1760 = vshrl.u32 %v1759, 7
        %v1761 = vsub.s32 %v1659, %v1760
        %v1762 = vrot.slane %v1621, %v1761
        %v1763 = vsel %vm1664, %v1762, %v1758
        %vm1764 = vcmask 1041409
        %v1765 = vsel %vm1764, %v1679, %v1665
        %vm1766 = vcmask 1042434
        %v1767 = vsel %vm1766, %v1693, %v1765
        %vm1768 = vcmask 1043459
        %v1769 = vsel %vm1768, %v1707, %v1767
        %vm1770 = vcmask 1044484
        %v1771 = vsel %vm1770, %v1721, %v1769
        %vm1772 = vcmask 1045509
        %v1773 = vsel %vm1772, %v1735, %v1771
        %vm1774 = vcmask 1046534
        %v1775 = vsel %vm1774, %v1749, %v1773
        %vm1776 = vcmask 1047559
        %v1777 = vsel %vm1776, %v1763, %v1775
        %vm1779 = vcmask 195584
        %1780 = vst.msk [vmem:[%s270] sm:$0xff] %vm1779, %v1777
        %v1781 = vlaneseq
        %v1782 = vshrl.u32 %v1781, 7
        %v1783 = vsub.s32 0, %v1782
        %v1784 = vrot.slane %v520, %v1783
        %v1785 = vlaneseq
        %v1786 = vshrl.u32 %v1785, 7
        %v1787 = vsub.s32 1, %v1786
        %v1788 = vrot.slane %v520, %v1787
        %v1789 = vlaneseq
        %v1790 = vshrl.u32 %v1789, 7
        %v1791 = vsub.s32 0, %v1790
        %v1792 = vrot.slane %v534, %v1791
        %v1793 = vlaneseq
        %v1794 = vshrl.u32 %v1793, 7
        %v1795 = vsub.s32 1, %v1794
        %v1796 = vrot.slane %v534, %v1795
        %v1797 = vlaneseq
        %v1798 = vshrl.u32 %v1797, 7
        %v1799 = vsub.s32 0, %v1798
        %v1800 = vrot.slane %v542, %v1799
        %v1801 = vlaneseq
        %v1802 = vshrl.u32 %v1801, 7
        %v1803 = vsub.s32 1, %v1802
        %v1804 = vrot.slane %v542, %v1803
        %v1805 = vlaneseq
        %v1806 = vshrl.u32 %v1805, 7
        %v1807 = vsub.s32 0, %v1806
        %v1808 = vrot.slane %v544, %v1807
        %v1809 = vlaneseq
        %v1810 = vshrl.u32 %v1809, 7
        %v1811 = vsub.s32 1, %v1810
        %v1812 = vrot.slane %v544, %v1811
        %v1813 = vlaneseq
        %v1814 = vshrl.u32 %v1813, 7
        %v1815 = vsub.s32 0, %v1814
        %v1816 = vrot.slane %v527, %v1815
        %v1817 = vlaneseq
        %v1818 = vshrl.u32 %v1817, 7
        %v1819 = vsub.s32 1, %v1818
        %v1820 = vrot.slane %v527, %v1819
        %v1821 = vlaneseq
        %v1822 = vshrl.u32 %v1821, 7
        %v1823 = vsub.s32 0, %v1822
        %v1824 = vrot.slane %v541, %v1823
        %v1825 = vlaneseq
        %v1826 = vshrl.u32 %v1825, 7
        %v1827 = vsub.s32 1, %v1826
        %v1828 = vrot.slane %v541, %v1827
        %v1829 = vlaneseq
        %v1830 = vshrl.u32 %v1829, 7
        %v1831 = vsub.s32 0, %v1830
        %v1832 = vrot.slane %v543, %v1831
        %v1833 = vlaneseq
        %v1834 = vshrl.u32 %v1833, 7
        %v1835 = vsub.s32 1, %v1834
        %v1836 = vrot.slane %v543, %v1835
        %v1837 = vlaneseq
        %v1838 = vshrl.u32 %v1837, 7
        %v1839 = vsub.s32 0, %v1838
        %v1840 = vrot.slane %v545, %v1839
        %v1841 = vlaneseq
        %v1842 = vshrl.u32 %v1841, 7
        %v1843 = vsub.s32 1, %v1842
        %v1844 = vrot.slane %v545, %v1843
        %v1861 = vmul.f32 %v1784, %v1135
        %v1862 = vmul.f32 %v1788, %v1137
        %v1863 = vmul.f32 %v1784, %v1139
        %v1864 = vmul.f32 %v1788, %v1141
        %v1865 = vmul.f32 %v1784, %v1143
        %v1866 = vmul.f32 %v1788, %v1145
        %v1867 = vmul.f32 %v1792, %v1147
        %v1868 = vmul.f32 %v1796, %v1149
        %v1869 = vmul.f32 %v1792, %v1151
        %v1870 = vmul.f32 %v1796, %v1153
        %v1871 = vmul.f32 %v1792, %v1155
        %v1872 = vmul.f32 %v1796, %v1157
        %v1873 = vmul.f32 %v1800, %v1159
        %v1874 = vmul.f32 %v1804, %v1161
        %v1875 = vmul.f32 %v1800, %v1163
        %v1876 = vmul.f32 %v1804, %v1165
        %v1877 = vmul.f32 %v1800, %v1167
        %v1878 = vmul.f32 %v1804, %v1169
        %v1879 = vmul.f32 %v1808, %v1171
        %v1880 = vmul.f32 %v1812, %v1173
        %v1881 = vmul.f32 %v1808, %v1175
        %v1882 = vmul.f32 %v1812, %v1177
        %v1883 = vmul.f32 %v1808, %v1179
        %v1884 = vmul.f32 %v1812, %v1181
        %v1885 = vmul.f32 %v1816, %v1183
        %v1886 = vmul.f32 %v1820, %v1185
        %v1887 = vmul.f32 %v1816, %v1187
        %v1888 = vmul.f32 %v1820, %v1189
        %v1889 = vmul.f32 %v1816, %v1191
        %v1890 = vmul.f32 %v1820, %v1193
        %v1891 = vmul.f32 %v1824, %v1195
        %v1892 = vmul.f32 %v1828, %v1197
        %v1893 = vmul.f32 %v1824, %v1199
        %v1894 = vmul.f32 %v1828, %v1201
        %v1895 = vmul.f32 %v1824, %v1203
        %v1896 = vmul.f32 %v1828, %v1205
        %v1897 = vmul.f32 %v1832, %v1207
        %v1898 = vmul.f32 %v1836, %v1209
        %v1899 = vmul.f32 %v1832, %v1211
        %v1900 = vmul.f32 %v1836, %v1213
        %v1901 = vmul.f32 %v1832, %v1215
        %v1902 = vmul.f32 %v1836, %v1217
        %v1903 = vmul.f32 %v1840, %v1219
        %v1904 = vmul.f32 %v1844, %v1221
        %v1905 = vmul.f32 %v1840, %v1223
        %v1906 = vmul.f32 %v1844, %v1225
        %v1907 = vmul.f32 %v1840, %v1227
        %v1908 = vmul.f32 %v1844, %v1229
        %v1909 = vadd.f32 %v1861, %v1862
        %1910 = vadd.xlane.f32.xlu0 %v1909
        %v1911 = vpop.xlane.xlu0 %1910
        %v1912 = vadd.f32 %v1863, %v1864
        %1913 = vadd.xlane.f32.xlu0 %v1912
        %v1914 = vpop.xlane.xlu0 %1913
        %v1915 = vadd.f32 %v1865, %v1866
        %1916 = vadd.xlane.f32.xlu0 %v1915
        %v1917 = vpop.xlane.xlu0 %1916
        %v1918 = vadd.f32 %v1867, %v1868
        %1919 = vadd.xlane.f32.xlu0 %v1918
        %v1920 = vpop.xlane.xlu0 %1919
        %v1921 = vadd.f32 %v1869, %v1870
        %1922 = vadd.xlane.f32.xlu0 %v1921
        %v1923 = vpop.xlane.xlu0 %1922
        %v1924 = vadd.f32 %v1871, %v1872
        %1925 = vadd.xlane.f32.xlu0 %v1924
        %v1926 = vpop.xlane.xlu0 %1925
        %v1927 = vadd.f32 %v1873, %v1874
        %1928 = vadd.xlane.f32.xlu0 %v1927
        %v1929 = vpop.xlane.xlu0 %1928
        %v1930 = vadd.f32 %v1875, %v1876
        %1931 = vadd.xlane.f32.xlu0 %v1930
        %v1932 = vpop.xlane.xlu0 %1931
        %v1933 = vadd.f32 %v1877, %v1878
        %1934 = vadd.xlane.f32.xlu0 %v1933
        %v1935 = vpop.xlane.xlu0 %1934
        %v1936 = vadd.f32 %v1879, %v1880
        %1937 = vadd.xlane.f32.xlu0 %v1936
        %v1938 = vpop.xlane.xlu0 %1937
        %v1939 = vadd.f32 %v1881, %v1882
        %1940 = vadd.xlane.f32.xlu0 %v1939
        %v1941 = vpop.xlane.xlu0 %1940
        %v1942 = vadd.f32 %v1883, %v1884
        %1943 = vadd.xlane.f32.xlu0 %v1942
        %v1944 = vpop.xlane.xlu0 %1943
        %v1945 = vadd.f32 %v1885, %v1886
        %1946 = vadd.xlane.f32.xlu0 %v1945
        %v1947 = vpop.xlane.xlu0 %1946
        %v1948 = vadd.f32 %v1887, %v1888
        %1949 = vadd.xlane.f32.xlu0 %v1948
        %v1950 = vpop.xlane.xlu0 %1949
        %v1951 = vadd.f32 %v1889, %v1890
        %1952 = vadd.xlane.f32.xlu0 %v1951
        %v1953 = vpop.xlane.xlu0 %1952
        %v1954 = vadd.f32 %v1891, %v1892
        %1955 = vadd.xlane.f32.xlu0 %v1954
        %v1956 = vpop.xlane.xlu0 %1955
        %v1957 = vadd.f32 %v1893, %v1894
        %1958 = vadd.xlane.f32.xlu0 %v1957
        %v1959 = vpop.xlane.xlu0 %1958
        %v1960 = vadd.f32 %v1895, %v1896
        %1961 = vadd.xlane.f32.xlu0 %v1960
        %v1962 = vpop.xlane.xlu0 %1961
        %v1963 = vadd.f32 %v1897, %v1898
        %1964 = vadd.xlane.f32.xlu0 %v1963
        %v1965 = vpop.xlane.xlu0 %1964
        %v1966 = vadd.f32 %v1899, %v1900
        %1967 = vadd.xlane.f32.xlu0 %v1966
        %v1968 = vpop.xlane.xlu0 %1967
        %v1969 = vadd.f32 %v1901, %v1902
        %1970 = vadd.xlane.f32.xlu0 %v1969
        %v1971 = vpop.xlane.xlu0 %1970
        %v1972 = vadd.f32 %v1903, %v1904
        %1973 = vadd.xlane.f32.xlu0 %v1972
        %v1974 = vpop.xlane.xlu0 %1973
        %v1975 = vadd.f32 %v1905, %v1906
        %1976 = vadd.xlane.f32.xlu0 %v1975
        %v1977 = vpop.xlane.xlu0 %1976
        %v1978 = vadd.f32 %v1907, %v1908
        %1979 = vadd.xlane.f32.xlu0 %v1978
        %v1980 = vpop.xlane.xlu0 %1979
        %v1981 = vmul.f32 %v1911, 11.968268
        %v1982 = vmul.f32 %v1914, 11.968268
        %v1983 = vmul.f32 %v1917, 11.968268
        %v1984 = vmul.f32 %v1920, 11.968268
        %v1985 = vmul.f32 %v1923, 11.968268
        %v1986 = vmul.f32 %v1926, 11.968268
        %v1987 = vmul.f32 %v1929, 11.968268
        %v1988 = vmul.f32 %v1932, 11.968268
        %v1989 = vmul.f32 %v1935, 11.968268
        %v1990 = vmul.f32 %v1938, 11.968268
        %v1991 = vmul.f32 %v1941, 11.968268
        %v1992 = vmul.f32 %v1944, 11.968268
        %v1993 = vmul.f32 %v1947, 11.968268
        %v1994 = vmul.f32 %v1950, 11.968268
        %v1995 = vmul.f32 %v1953, 11.968268
        %v1996 = vmul.f32 %v1956, 11.968268
        %v1997 = vmul.f32 %v1959, 11.968268
        %v1998 = vmul.f32 %v1962, 11.968268
        %v1999 = vmul.f32 %v1965, 11.968268
        %v2000 = vmul.f32 %v1968, 11.968268
        %v2001 = vmul.f32 %v1971, 11.968268
        %v2002 = vmul.f32 %v1974, 11.968268
        %v2003 = vmul.f32 %v1977, 11.968268
        %v2004 = vmul.f32 %v1980, 11.968268
        %v2005 = vlog2.pop %v1981
        %v2006 = vmul.f32 %v2005, 0.6931472
        %v2007 = vlog2.pop %v1982
        %v2008 = vmul.f32 %v2007, 0.6931472
        %v2009 = vlog2.pop %v1983
        %v2010 = vmul.f32 %v2009, 0.6931472
        %v2011 = vlog2.pop %v1984
        %v2012 = vmul.f32 %v2011, 0.6931472
        %v2013 = vlog2.pop %v1985
        %v2014 = vmul.f32 %v2013, 0.6931472
        %v2015 = vlog2.pop %v1986
        %v2016 = vmul.f32 %v2015, 0.6931472
        %v2017 = vlog2.pop %v1987
        %v2018 = vmul.f32 %v2017, 0.6931472
        %v2019 = vlog2.pop %v1988
        %v2020 = vmul.f32 %v2019, 0.6931472
        %v2021 = vlog2.pop %v1989
        %v2022 = vmul.f32 %v2021, 0.6931472
        %v2023 = vlog2.pop %v1990
        %v2024 = vmul.f32 %v2023, 0.6931472
        %v2025 = vlog2.pop %v1991
        %v2026 = vmul.f32 %v2025, 0.6931472
        %v2027 = vlog2.pop %v1992
        %v2028 = vmul.f32 %v2027, 0.6931472
        %v2029 = vlog2.pop %v1993
        %v2030 = vmul.f32 %v2029, 0.6931472
        %v2031 = vlog2.pop %v1994
        %v2032 = vmul.f32 %v2031, 0.6931472
        %v2033 = vlog2.pop %v1995
        %v2034 = vmul.f32 %v2033, 0.6931472
        %v2035 = vlog2.pop %v1996
        %v2036 = vmul.f32 %v2035, 0.6931472
        %v2037 = vlog2.pop %v1997
        %v2038 = vmul.f32 %v2037, 0.6931472
        %v2039 = vlog2.pop %v1998
        %v2040 = vmul.f32 %v2039, 0.6931472
        %v2041 = vlog2.pop %v1999
        %v2042 = vmul.f32 %v2041, 0.6931472
        %v2043 = vlog2.pop %v2000
        %v2044 = vmul.f32 %v2043, 0.6931472
        %v2045 = vlog2.pop %v2001
        %v2046 = vmul.f32 %v2045, 0.6931472
        %v2047 = vlog2.pop %v2002
        %v2048 = vmul.f32 %v2047, 0.6931472
        %v2049 = vlog2.pop %v2003
        %v2050 = vmul.f32 %v2049, 0.6931472
        %v2051 = vlog2.pop %v2004
        %v2052 = vmul.f32 %v2051, 0.6931472
        %v2053 = vmul.f32 %v2006, 0.33333334
        %v2054 = vmul.f32 %v2008, 0.33333334
        %v2055 = vmul.f32 %v2010, 0.33333334
        %v2056 = vmul.f32 %v2012, 0.33333334
        %v2057 = vmul.f32 %v2014, 0.33333334
        %v2058 = vmul.f32 %v2016, 0.33333334
        %v2059 = vmul.f32 %v2018, 0.33333334
        %v2060 = vmul.f32 %v2020, 0.33333334
        %v2061 = vmul.f32 %v2022, 0.33333334
        %v2062 = vmul.f32 %v2024, 0.33333334
        %v2063 = vmul.f32 %v2026, 0.33333334
        %v2064 = vmul.f32 %v2028, 0.33333334
        %v2065 = vmul.f32 %v2030, 0.33333334
        %v2066 = vmul.f32 %v2032, 0.33333334
        %v2067 = vmul.f32 %v2034, 0.33333334
        %v2068 = vmul.f32 %v2036, 0.33333334
        %v2069 = vmul.f32 %v2038, 0.33333334
        %v2070 = vmul.f32 %v2040, 0.33333334
        %v2071 = vmul.f32 %v2042, 0.33333334
        %v2072 = vmul.f32 %v2044, 0.33333334
        %v2073 = vmul.f32 %v2046, 0.33333334
        %v2074 = vmul.f32 %v2048, 0.33333334
        %v2075 = vmul.f32 %v2050, 0.33333334
        %v2076 = vmul.f32 %v2052, 0.33333334
        %v2077 = vmul.f32 %v2053, 1.442695
        %v2078 = vpow.pop %v2077
        %v2079 = vmul.f32 %v2054, 1.442695
        %v2080 = vpow.pop %v2079
        %v2081 = vmul.f32 %v2055, 1.442695
        %v2082 = vpow.pop %v2081
        %v2083 = vmul.f32 %v2056, 1.442695
        %v2084 = vpow.pop %v2083
        %v2085 = vmul.f32 %v2057, 1.442695
        %v2086 = vpow.pop %v2085
        %v2087 = vmul.f32 %v2058, 1.442695
        %v2088 = vpow.pop %v2087
        %v2089 = vmul.f32 %v2059, 1.442695
        %v2090 = vpow.pop %v2089
        %v2091 = vmul.f32 %v2060, 1.442695
        %v2092 = vpow.pop %v2091
        %v2093 = vmul.f32 %v2061, 1.442695
        %v2094 = vpow.pop %v2093
        %v2095 = vmul.f32 %v2062, 1.442695
        %v2096 = vpow.pop %v2095
        %v2097 = vmul.f32 %v2063, 1.442695
        %v2098 = vpow.pop %v2097
        %v2099 = vmul.f32 %v2064, 1.442695
        %v2100 = vpow.pop %v2099
        %v2101 = vmul.f32 %v2065, 1.442695
        %v2102 = vpow.pop %v2101
        %v2103 = vmul.f32 %v2066, 1.442695
        %v2104 = vpow.pop %v2103
        %v2105 = vmul.f32 %v2067, 1.442695
        %v2106 = vpow.pop %v2105
        %v2107 = vmul.f32 %v2068, 1.442695
        %v2108 = vpow.pop %v2107
        %v2109 = vmul.f32 %v2069, 1.442695
        %v2110 = vpow.pop %v2109
        %v2111 = vmul.f32 %v2070, 1.442695
        %v2112 = vpow.pop %v2111
        %v2113 = vmul.f32 %v2071, 1.442695
        %v2114 = vpow.pop %v2113
        %v2115 = vmul.f32 %v2072, 1.442695
        %v2116 = vpow.pop %v2115
        %v2117 = vmul.f32 %v2073, 1.442695
        %v2118 = vpow.pop %v2117
        %v2119 = vmul.f32 %v2074, 1.442695
        %v2120 = vpow.pop %v2119
        %v2121 = vmul.f32 %v2075, 1.442695
        %v2122 = vpow.pop %v2121
        %v2123 = vmul.f32 %v2076, 1.442695
        %v2124 = vpow.pop %v2123
        %v2149 = vlaneseq
        %v2150 = vshrl.u32 %v2149, 7
        %v2151 = vsub.s32 %v1647, %v2150
        %v2152 = vrot.slane %v2078, %v2151
        %v2153 = vlaneseq
        %v2154 = vshrl.u32 %v2153, 7
        %v2155 = vsub.s32 %v1652, %v2154
        %v2156 = vrot.slane %v2080, %v2155
        %v2157 = vsel %vm1657, %v2156, %v2152
        %v2158 = vlaneseq
        %v2159 = vshrl.u32 %v2158, 7
        %v2160 = vsub.s32 %v1659, %v2159
        %v2161 = vrot.slane %v2082, %v2160
        %v2162 = vsel %vm1664, %v2161, %v2157
        %v2163 = vlaneseq
        %v2164 = vshrl.u32 %v2163, 7
        %v2165 = vsub.s32 %v1647, %v2164
        %v2166 = vrot.slane %v2084, %v2165
        %v2167 = vlaneseq
        %v2168 = vshrl.u32 %v2167, 7
        %v2169 = vsub.s32 %v1652, %v2168
        %v2170 = vrot.slane %v2086, %v2169
        %v2171 = vsel %vm1657, %v2170, %v2166
        %v2172 = vlaneseq
        %v2173 = vshrl.u32 %v2172, 7
        %v2174 = vsub.s32 %v1659, %v2173
        %v2175 = vrot.slane %v2088, %v2174
        %v2176 = vsel %vm1664, %v2175, %v2171
        %v2177 = vlaneseq
        %v2178 = vshrl.u32 %v2177, 7
        %v2179 = vsub.s32 %v1647, %v2178
        %v2180 = vrot.slane %v2090, %v2179
        %v2181 = vlaneseq
        %v2182 = vshrl.u32 %v2181, 7
        %v2183 = vsub.s32 %v1652, %v2182
        %v2184 = vrot.slane %v2092, %v2183
        %v2185 = vsel %vm1657, %v2184, %v2180
        %v2186 = vlaneseq
        %v2187 = vshrl.u32 %v2186, 7
        %v2188 = vsub.s32 %v1659, %v2187
        %v2189 = vrot.slane %v2094, %v2188
        %v2190 = vsel %vm1664, %v2189, %v2185
        %v2191 = vlaneseq
        %v2192 = vshrl.u32 %v2191, 7
        %v2193 = vsub.s32 %v1647, %v2192
        %v2194 = vrot.slane %v2096, %v2193
        %v2195 = vlaneseq
        %v2196 = vshrl.u32 %v2195, 7
        %v2197 = vsub.s32 %v1652, %v2196
        %v2198 = vrot.slane %v2098, %v2197
        %v2199 = vsel %vm1657, %v2198, %v2194
        %v2200 = vlaneseq
        %v2201 = vshrl.u32 %v2200, 7
        %v2202 = vsub.s32 %v1659, %v2201
        %v2203 = vrot.slane %v2100, %v2202
        %v2204 = vsel %vm1664, %v2203, %v2199
        %v2205 = vlaneseq
        %v2206 = vshrl.u32 %v2205, 7
        %v2207 = vsub.s32 %v1647, %v2206
        %v2208 = vrot.slane %v2102, %v2207
        %v2209 = vlaneseq
        %v2210 = vshrl.u32 %v2209, 7
        %v2211 = vsub.s32 %v1652, %v2210
        %v2212 = vrot.slane %v2104, %v2211
        %v2213 = vsel %vm1657, %v2212, %v2208
        %v2214 = vlaneseq
        %v2215 = vshrl.u32 %v2214, 7
        %v2216 = vsub.s32 %v1659, %v2215
        %v2217 = vrot.slane %v2106, %v2216
        %v2218 = vsel %vm1664, %v2217, %v2213
        %v2219 = vlaneseq
        %v2220 = vshrl.u32 %v2219, 7
        %v2221 = vsub.s32 %v1647, %v2220
        %v2222 = vrot.slane %v2108, %v2221
        %v2223 = vlaneseq
        %v2224 = vshrl.u32 %v2223, 7
        %v2225 = vsub.s32 %v1652, %v2224
        %v2226 = vrot.slane %v2110, %v2225
        %v2227 = vsel %vm1657, %v2226, %v2222
        %v2228 = vlaneseq
        %v2229 = vshrl.u32 %v2228, 7
        %v2230 = vsub.s32 %v1659, %v2229
        %v2231 = vrot.slane %v2112, %v2230
        %v2232 = vsel %vm1664, %v2231, %v2227
        %v2233 = vlaneseq
        %v2234 = vshrl.u32 %v2233, 7
        %v2235 = vsub.s32 %v1647, %v2234
        %v2236 = vrot.slane %v2114, %v2235
        %v2237 = vlaneseq
        %v2238 = vshrl.u32 %v2237, 7
        %v2239 = vsub.s32 %v1652, %v2238
        %v2240 = vrot.slane %v2116, %v2239
        %v2241 = vsel %vm1657, %v2240, %v2236
        %v2242 = vlaneseq
        %v2243 = vshrl.u32 %v2242, 7
        %v2244 = vsub.s32 %v1659, %v2243
        %v2245 = vrot.slane %v2118, %v2244
        %v2246 = vsel %vm1664, %v2245, %v2241
        %v2247 = vlaneseq
        %v2248 = vshrl.u32 %v2247, 7
        %v2249 = vsub.s32 %v1647, %v2248
        %v2250 = vrot.slane %v2120, %v2249
        %v2251 = vlaneseq
        %v2252 = vshrl.u32 %v2251, 7
        %v2253 = vsub.s32 %v1652, %v2252
        %v2254 = vrot.slane %v2122, %v2253
        %v2255 = vsel %vm1657, %v2254, %v2250
        %v2256 = vlaneseq
        %v2257 = vshrl.u32 %v2256, 7
        %v2258 = vsub.s32 %v1659, %v2257
        %v2259 = vrot.slane %v2124, %v2258
        %v2260 = vsel %vm1664, %v2259, %v2255
        %v2261 = vsel %vm1764, %v2176, %v2162
        %v2262 = vsel %vm1766, %v2190, %v2261
        %v2263 = vsel %vm1768, %v2204, %v2262
        %v2264 = vsel %vm1770, %v2218, %v2263
        %v2265 = vsel %vm1772, %v2232, %v2264
        %v2266 = vsel %vm1774, %v2246, %v2265
        %v2267 = vsel %vm1776, %v2260, %v2266
        %s2269 = scalar_lea.vmem %s270, 8 [#allocation2]
        %2270 = vst.msk [vmem:[%s2269] sm:$0xff] %vm1779, %v2267
        %v2271 = vlaneseq
        %v2272 = vshrl.u32 %v2271, 7
        %v2273 = vsub.s32 0, %v2272
        %v2274 = vrot.slane %v574, %v2273
        %v2275 = vlaneseq
        %v2276 = vshrl.u32 %v2275, 7
        %v2277 = vsub.s32 1, %v2276
        %v2278 = vrot.slane %v574, %v2277
        %v2279 = vlaneseq
        %v2280 = vshrl.u32 %v2279, 7
        %v2281 = vsub.s32 0, %v2280
        %v2282 = vrot.slane %v588, %v2281
        %v2283 = vlaneseq
        %v2284 = vshrl.u32 %v2283, 7
        %v2285 = vsub.s32 1, %v2284
        %v2286 = vrot.slane %v588, %v2285
        %v2287 = vlaneseq
        %v2288 = vshrl.u32 %v2287, 7
        %v2289 = vsub.s32 0, %v2288
        %v2290 = vrot.slane %v596, %v2289
        %v2291 = vlaneseq
        %v2292 = vshrl.u32 %v2291, 7
        %v2293 = vsub.s32 1, %v2292
        %v2294 = vrot.slane %v596, %v2293
        %v2295 = vlaneseq
        %v2296 = vshrl.u32 %v2295, 7
        %v2297 = vsub.s32 0, %v2296
        %v2298 = vrot.slane %v598, %v2297
        %v2299 = vlaneseq
        %v2300 = vshrl.u32 %v2299, 7
        %v2301 = vsub.s32 1, %v2300
        %v2302 = vrot.slane %v598, %v2301
        %v2303 = vlaneseq
        %v2304 = vshrl.u32 %v2303, 7
        %v2305 = vsub.s32 0, %v2304
        %v2306 = vrot.slane %v581, %v2305
        %v2307 = vlaneseq
        %v2308 = vshrl.u32 %v2307, 7
        %v2309 = vsub.s32 1, %v2308
        %v2310 = vrot.slane %v581, %v2309
        %v2311 = vlaneseq
        %v2312 = vshrl.u32 %v2311, 7
        %v2313 = vsub.s32 0, %v2312
        %v2314 = vrot.slane %v595, %v2313
        %v2315 = vlaneseq
        %v2316 = vshrl.u32 %v2315, 7
        %v2317 = vsub.s32 1, %v2316
        %v2318 = vrot.slane %v595, %v2317
        %v2319 = vlaneseq
        %v2320 = vshrl.u32 %v2319, 7
        %v2321 = vsub.s32 0, %v2320
        %v2322 = vrot.slane %v597, %v2321
        %v2323 = vlaneseq
        %v2324 = vshrl.u32 %v2323, 7
        %v2325 = vsub.s32 1, %v2324
        %v2326 = vrot.slane %v597, %v2325
        %v2327 = vlaneseq
        %v2328 = vshrl.u32 %v2327, 7
        %v2329 = vsub.s32 0, %v2328
        %v2330 = vrot.slane %v599, %v2329
        %v2331 = vlaneseq
        %v2332 = vshrl.u32 %v2331, 7
        %v2333 = vsub.s32 1, %v2332
        %v2334 = vrot.slane %v599, %v2333
        %v2351 = vmul.f32 %v2274, %v1135
        %v2352 = vmul.f32 %v2278, %v1137
        %v2353 = vmul.f32 %v2274, %v1139
        %v2354 = vmul.f32 %v2278, %v1141
        %v2355 = vmul.f32 %v2274, %v1143
        %v2356 = vmul.f32 %v2278, %v1145
        %v2357 = vmul.f32 %v2282, %v1147
        %v2358 = vmul.f32 %v2286, %v1149
        %v2359 = vmul.f32 %v2282, %v1151
        %v2360 = vmul.f32 %v2286, %v1153
        %v2361 = vmul.f32 %v2282, %v1155
        %v2362 = vmul.f32 %v2286, %v1157
        %v2363 = vmul.f32 %v2290, %v1159
        %v2364 = vmul.f32 %v2294, %v1161
        %v2365 = vmul.f32 %v2290, %v1163
        %v2366 = vmul.f32 %v2294, %v1165
        %v2367 = vmul.f32 %v2290, %v1167
        %v2368 = vmul.f32 %v2294, %v1169
        %v2369 = vmul.f32 %v2298, %v1171
        %v2370 = vmul.f32 %v2302, %v1173
        %v2371 = vmul.f32 %v2298, %v1175
        %v2372 = vmul.f32 %v2302, %v1177
        %v2373 = vmul.f32 %v2298, %v1179
        %v2374 = vmul.f32 %v2302, %v1181
        %v2375 = vmul.f32 %v2306, %v1183
        %v2376 = vmul.f32 %v2310, %v1185
        %v2377 = vmul.f32 %v2306, %v1187
        %v2378 = vmul.f32 %v2310, %v1189
        %v2379 = vmul.f32 %v2306, %v1191
        %v2380 = vmul.f32 %v2310, %v1193
        %v2381 = vmul.f32 %v2314, %v1195
        %v2382 = vmul.f32 %v2318, %v1197
        %v2383 = vmul.f32 %v2314, %v1199
        %v2384 = vmul.f32 %v2318, %v1201
        %v2385 = vmul.f32 %v2314, %v1203
        %v2386 = vmul.f32 %v2318, %v1205
        %v2387 = vmul.f32 %v2322, %v1207
        %v2388 = vmul.f32 %v2326, %v1209
        %v2389 = vmul.f32 %v2322, %v1211
        %v2390 = vmul.f32 %v2326, %v1213
        %v2391 = vmul.f32 %v2322, %v1215
        %v2392 = vmul.f32 %v2326, %v1217
        %v2393 = vmul.f32 %v2330, %v1219
        %v2394 = vmul.f32 %v2334, %v1221
        %v2395 = vmul.f32 %v2330, %v1223
        %v2396 = vmul.f32 %v2334, %v1225
        %v2397 = vmul.f32 %v2330, %v1227
        %v2398 = vmul.f32 %v2334, %v1229
        %v2399 = vadd.f32 %v2351, %v2352
        %2400 = vadd.xlane.f32.xlu0 %v2399
        %v2401 = vpop.xlane.xlu0 %2400
        %v2402 = vadd.f32 %v2353, %v2354
        %2403 = vadd.xlane.f32.xlu0 %v2402
        %v2404 = vpop.xlane.xlu0 %2403
        %v2405 = vadd.f32 %v2355, %v2356
        %2406 = vadd.xlane.f32.xlu0 %v2405
        %v2407 = vpop.xlane.xlu0 %2406
        %v2408 = vadd.f32 %v2357, %v2358
        %2409 = vadd.xlane.f32.xlu0 %v2408
        %v2410 = vpop.xlane.xlu0 %2409
        %v2411 = vadd.f32 %v2359, %v2360
        %2412 = vadd.xlane.f32.xlu0 %v2411
        %v2413 = vpop.xlane.xlu0 %2412
        %v2414 = vadd.f32 %v2361, %v2362
        %2415 = vadd.xlane.f32.xlu0 %v2414
        %v2416 = vpop.xlane.xlu0 %2415
        %v2417 = vadd.f32 %v2363, %v2364
        %2418 = vadd.xlane.f32.xlu0 %v2417
        %v2419 = vpop.xlane.xlu0 %2418
        %v2420 = vadd.f32 %v2365, %v2366
        %2421 = vadd.xlane.f32.xlu0 %v2420
        %v2422 = vpop.xlane.xlu0 %2421
        %v2423 = vadd.f32 %v2367, %v2368
        %2424 = vadd.xlane.f32.xlu0 %v2423
        %v2425 = vpop.xlane.xlu0 %2424
        %v2426 = vadd.f32 %v2369, %v2370
        %2427 = vadd.xlane.f32.xlu0 %v2426
        %v2428 = vpop.xlane.xlu0 %2427
        %v2429 = vadd.f32 %v2371, %v2372
        %2430 = vadd.xlane.f32.xlu0 %v2429
        %v2431 = vpop.xlane.xlu0 %2430
        %v2432 = vadd.f32 %v2373, %v2374
        %2433 = vadd.xlane.f32.xlu0 %v2432
        %v2434 = vpop.xlane.xlu0 %2433
        %v2435 = vadd.f32 %v2375, %v2376
        %2436 = vadd.xlane.f32.xlu0 %v2435
        %v2437 = vpop.xlane.xlu0 %2436
        %v2438 = vadd.f32 %v2377, %v2378
        %2439 = vadd.xlane.f32.xlu0 %v2438
        %v2440 = vpop.xlane.xlu0 %2439
        %v2441 = vadd.f32 %v2379, %v2380
        %2442 = vadd.xlane.f32.xlu0 %v2441
        %v2443 = vpop.xlane.xlu0 %2442
        %v2444 = vadd.f32 %v2381, %v2382
        %2445 = vadd.xlane.f32.xlu0 %v2444
        %v2446 = vpop.xlane.xlu0 %2445
        %v2447 = vadd.f32 %v2383, %v2384
        %2448 = vadd.xlane.f32.xlu0 %v2447
        %v2449 = vpop.xlane.xlu0 %2448
        %v2450 = vadd.f32 %v2385, %v2386
        %2451 = vadd.xlane.f32.xlu0 %v2450
        %v2452 = vpop.xlane.xlu0 %2451
        %v2453 = vadd.f32 %v2387, %v2388
        %2454 = vadd.xlane.f32.xlu0 %v2453
        %v2455 = vpop.xlane.xlu0 %2454
        %v2456 = vadd.f32 %v2389, %v2390
        %2457 = vadd.xlane.f32.xlu0 %v2456
        %v2458 = vpop.xlane.xlu0 %2457
        %v2459 = vadd.f32 %v2391, %v2392
        %2460 = vadd.xlane.f32.xlu0 %v2459
        %v2461 = vpop.xlane.xlu0 %2460
        %v2462 = vadd.f32 %v2393, %v2394
        %2463 = vadd.xlane.f32.xlu0 %v2462
        %v2464 = vpop.xlane.xlu0 %2463
        %v2465 = vadd.f32 %v2395, %v2396
        %2466 = vadd.xlane.f32.xlu0 %v2465
        %v2467 = vpop.xlane.xlu0 %2466
        %v2468 = vadd.f32 %v2397, %v2398
        %2469 = vadd.xlane.f32.xlu0 %v2468
        %v2470 = vpop.xlane.xlu0 %2469
        %v2471 = vmul.f32 %v2401, 15.957691
        %v2472 = vmul.f32 %v2404, 15.957691
        %v2473 = vmul.f32 %v2407, 15.957691
        %v2474 = vmul.f32 %v2410, 15.957691
        %v2475 = vmul.f32 %v2413, 15.957691
        %v2476 = vmul.f32 %v2416, 15.957691
        %v2477 = vmul.f32 %v2419, 15.957691
        %v2478 = vmul.f32 %v2422, 15.957691
        %v2479 = vmul.f32 %v2425, 15.957691
        %v2480 = vmul.f32 %v2428, 15.957691
        %v2481 = vmul.f32 %v2431, 15.957691
        %v2482 = vmul.f32 %v2434, 15.957691
        %v2483 = vmul.f32 %v2437, 15.957691
        %v2484 = vmul.f32 %v2440, 15.957691
        %v2485 = vmul.f32 %v2443, 15.957691
        %v2486 = vmul.f32 %v2446, 15.957691
        %v2487 = vmul.f32 %v2449, 15.957691
        %v2488 = vmul.f32 %v2452, 15.957691
        %v2489 = vmul.f32 %v2455, 15.957691
        %v2490 = vmul.f32 %v2458, 15.957691
        %v2491 = vmul.f32 %v2461, 15.957691
        %v2492 = vmul.f32 %v2464, 15.957691
        %v2493 = vmul.f32 %v2467, 15.957691
        %v2494 = vmul.f32 %v2470, 15.957691
        %v2495 = vrsqrt.pop %v2471
        %v2496 = vmul.f32 %v2471, %v2495
        %vm2497 = vcmp.eq.f32.partialorder %v2471, inf
        %v2498 = vsel %vm2497, %v2471, %v2496
        %vm2499 = vcmp.eq.f32.partialorder %v2471, 0.0
        %v2500 = vand.u32 %v2471, 2147483648
        %v2501 = vsel %vm2499, %v2500, %v2498
        %v2502 = vrsqrt.pop %v2472
        %v2503 = vmul.f32 %v2472, %v2502
        %vm2504 = vcmp.eq.f32.partialorder %v2472, inf
        %v2505 = vsel %vm2504, %v2472, %v2503
        %vm2506 = vcmp.eq.f32.partialorder %v2472, 0.0
        %v2507 = vand.u32 %v2472, 2147483648
        %v2508 = vsel %vm2506, %v2507, %v2505
        %v2509 = vrsqrt.pop %v2473
        %v2510 = vmul.f32 %v2473, %v2509
        %vm2511 = vcmp.eq.f32.partialorder %v2473, inf
        %v2512 = vsel %vm2511, %v2473, %v2510
        %vm2513 = vcmp.eq.f32.partialorder %v2473, 0.0
        %v2514 = vand.u32 %v2473, 2147483648
        %v2515 = vsel %vm2513, %v2514, %v2512
        %v2516 = vrsqrt.pop %v2474
        %v2517 = vmul.f32 %v2474, %v2516
        %vm2518 = vcmp.eq.f32.partialorder %v2474, inf
        %v2519 = vsel %vm2518, %v2474, %v2517
        %vm2520 = vcmp.eq.f32.partialorder %v2474, 0.0
        %v2521 = vand.u32 %v2474, 2147483648
        %v2522 = vsel %vm2520, %v2521, %v2519
        %v2523 = vrsqrt.pop %v2475
        %v2524 = vmul.f32 %v2475, %v2523
        %vm2525 = vcmp.eq.f32.partialorder %v2475, inf
        %v2526 = vsel %vm2525, %v2475, %v2524
        %vm2527 = vcmp.eq.f32.partialorder %v2475, 0.0
        %v2528 = vand.u32 %v2475, 2147483648
        %v2529 = vsel %vm2527, %v2528, %v2526
        %v2530 = vrsqrt.pop %v2476
        %v2531 = vmul.f32 %v2476, %v2530
        %vm2532 = vcmp.eq.f32.partialorder %v2476, inf
        %v2533 = vsel %vm2532, %v2476, %v2531
        %vm2534 = vcmp.eq.f32.partialorder %v2476, 0.0
        %v2535 = vand.u32 %v2476, 2147483648
        %v2536 = vsel %vm2534, %v2535, %v2533
        %v2537 = vrsqrt.pop %v2477
        %v2538 = vmul.f32 %v2477, %v2537
        %vm2539 = vcmp.eq.f32.partialorder %v2477, inf
        %v2540 = vsel %vm2539, %v2477, %v2538
        %vm2541 = vcmp.eq.f32.partialorder %v2477, 0.0
        %v2542 = vand.u32 %v2477, 2147483648
        %v2543 = vsel %vm2541, %v2542, %v2540
        %v2544 = vrsqrt.pop %v2478
        %v2545 = vmul.f32 %v2478, %v2544
        %vm2546 = vcmp.eq.f32.partialorder %v2478, inf
        %v2547 = vsel %vm2546, %v2478, %v2545
        %vm2548 = vcmp.eq.f32.partialorder %v2478, 0.0
        %v2549 = vand.u32 %v2478, 2147483648
        %v2550 = vsel %vm2548, %v2549, %v2547
        %v2551 = vrsqrt.pop %v2479
        %v2552 = vmul.f32 %v2479, %v2551
        %vm2553 = vcmp.eq.f32.partialorder %v2479, inf
        %v2554 = vsel %vm2553, %v2479, %v2552
        %vm2555 = vcmp.eq.f32.partialorder %v2479, 0.0
        %v2556 = vand.u32 %v2479, 2147483648
        %v2557 = vsel %vm2555, %v2556, %v2554
        %v2558 = vrsqrt.pop %v2480
        %v2559 = vmul.f32 %v2480, %v2558
        %vm2560 = vcmp.eq.f32.partialorder %v2480, inf
        %v2561 = vsel %vm2560, %v2480, %v2559
        %vm2562 = vcmp.eq.f32.partialorder %v2480, 0.0
        %v2563 = vand.u32 %v2480, 2147483648
        %v2564 = vsel %vm2562, %v2563, %v2561
        %v2565 = vrsqrt.pop %v2481
        %v2566 = vmul.f32 %v2481, %v2565
        %vm2567 = vcmp.eq.f32.partialorder %v2481, inf
        %v2568 = vsel %vm2567, %v2481, %v2566
        %vm2569 = vcmp.eq.f32.partialorder %v2481, 0.0
        %v2570 = vand.u32 %v2481, 2147483648
        %v2571 = vsel %vm2569, %v2570, %v2568
        %v2572 = vrsqrt.pop %v2482
        %v2573 = vmul.f32 %v2482, %v2572
        %vm2574 = vcmp.eq.f32.partialorder %v2482, inf
        %v2575 = vsel %vm2574, %v2482, %v2573
        %vm2576 = vcmp.eq.f32.partialorder %v2482, 0.0
        %v2577 = vand.u32 %v2482, 2147483648
        %v2578 = vsel %vm2576, %v2577, %v2575
        %v2579 = vrsqrt.pop %v2483
        %v2580 = vmul.f32 %v2483, %v2579
        %vm2581 = vcmp.eq.f32.partialorder %v2483, inf
        %v2582 = vsel %vm2581, %v2483, %v2580
        %vm2583 = vcmp.eq.f32.partialorder %v2483, 0.0
        %v2584 = vand.u32 %v2483, 2147483648
        %v2585 = vsel %vm2583, %v2584, %v2582
        %v2586 = vrsqrt.pop %v2484
        %v2587 = vmul.f32 %v2484, %v2586
        %vm2588 = vcmp.eq.f32.partialorder %v2484, inf
        %v2589 = vsel %vm2588, %v2484, %v2587
        %vm2590 = vcmp.eq.f32.partialorder %v2484, 0.0
        %v2591 = vand.u32 %v2484, 2147483648
        %v2592 = vsel %vm2590, %v2591, %v2589
        %v2593 = vrsqrt.pop %v2485
        %v2594 = vmul.f32 %v2485, %v2593
        %vm2595 = vcmp.eq.f32.partialorder %v2485, inf
        %v2596 = vsel %vm2595, %v2485, %v2594
        %vm2597 = vcmp.eq.f32.partialorder %v2485, 0.0
        %v2598 = vand.u32 %v2485, 2147483648
        %v2599 = vsel %vm2597, %v2598, %v2596
        %v2600 = vrsqrt.pop %v2486
        %v2601 = vmul.f32 %v2486, %v2600
        %vm2602 = vcmp.eq.f32.partialorder %v2486, inf
        %v2603 = vsel %vm2602, %v2486, %v2601
        %vm2604 = vcmp.eq.f32.partialorder %v2486, 0.0
        %v2605 = vand.u32 %v2486, 2147483648
        %v2606 = vsel %vm2604, %v2605, %v2603
        %v2607 = vrsqrt.pop %v2487
        %v2608 = vmul.f32 %v2487, %v2607
        %vm2609 = vcmp.eq.f32.partialorder %v2487, inf
        %v2610 = vsel %vm2609, %v2487, %v2608
        %vm2611 = vcmp.eq.f32.partialorder %v2487, 0.0
        %v2612 = vand.u32 %v2487, 2147483648
        %v2613 = vsel %vm2611, %v2612, %v2610
        %v2614 = vrsqrt.pop %v2488
        %v2615 = vmul.f32 %v2488, %v2614
        %vm2616 = vcmp.eq.f32.partialorder %v2488, inf
        %v2617 = vsel %vm2616, %v2488, %v2615
        %vm2618 = vcmp.eq.f32.partialorder %v2488, 0.0
        %v2619 = vand.u32 %v2488, 2147483648
        %v2620 = vsel %vm2618, %v2619, %v2617
        %v2621 = vrsqrt.pop %v2489
        %v2622 = vmul.f32 %v2489, %v2621
        %vm2623 = vcmp.eq.f32.partialorder %v2489, inf
        %v2624 = vsel %vm2623, %v2489, %v2622
        %vm2625 = vcmp.eq.f32.partialorder %v2489, 0.0
        %v2626 = vand.u32 %v2489, 2147483648
        %v2627 = vsel %vm2625, %v2626, %v2624
        %v2628 = vrsqrt.pop %v2490
        %v2629 = vmul.f32 %v2490, %v2628
        %vm2630 = vcmp.eq.f32.partialorder %v2490, inf
        %v2631 = vsel %vm2630, %v2490, %v2629
        %vm2632 = vcmp.eq.f32.partialorder %v2490, 0.0
        %v2633 = vand.u32 %v2490, 2147483648
        %v2634 = vsel %vm2632, %v2633, %v2631
        %v2635 = vrsqrt.pop %v2491
        %v2636 = vmul.f32 %v2491, %v2635
        %vm2637 = vcmp.eq.f32.partialorder %v2491, inf
        %v2638 = vsel %vm2637, %v2491, %v2636
        %vm2639 = vcmp.eq.f32.partialorder %v2491, 0.0
        %v2640 = vand.u32 %v2491, 2147483648
        %v2641 = vsel %vm2639, %v2640, %v2638
        %v2642 = vrsqrt.pop %v2492
        %v2643 = vmul.f32 %v2492, %v2642
        %vm2644 = vcmp.eq.f32.partialorder %v2492, inf
        %v2645 = vsel %vm2644, %v2492, %v2643
        %vm2646 = vcmp.eq.f32.partialorder %v2492, 0.0
        %v2647 = vand.u32 %v2492, 2147483648
        %v2648 = vsel %vm2646, %v2647, %v2645
        %v2649 = vrsqrt.pop %v2493
        %v2650 = vmul.f32 %v2493, %v2649
        %vm2651 = vcmp.eq.f32.partialorder %v2493, inf
        %v2652 = vsel %vm2651, %v2493, %v2650
        %vm2653 = vcmp.eq.f32.partialorder %v2493, 0.0
        %v2654 = vand.u32 %v2493, 2147483648
        %v2655 = vsel %vm2653, %v2654, %v2652
        %v2656 = vrsqrt.pop %v2494
        %v2657 = vmul.f32 %v2494, %v2656
        %vm2658 = vcmp.eq.f32.partialorder %v2494, inf
        %v2659 = vsel %vm2658, %v2494, %v2657
        %vm2660 = vcmp.eq.f32.partialorder %v2494, 0.0
        %v2661 = vand.u32 %v2494, 2147483648
        %v2662 = vsel %vm2660, %v2661, %v2659
        %v2663 = vrsqrt.pop %v2501
        %v2664 = vmul.f32 %v2501, %v2663
        %vm2665 = vcmp.eq.f32.partialorder %v2501, inf
        %v2666 = vsel %vm2665, %v2501, %v2664
        %vm2667 = vcmp.eq.f32.partialorder %v2501, 0.0
        %v2668 = vand.u32 %v2501, 2147483648
        %v2669 = vsel %vm2667, %v2668, %v2666
        %v2670 = vrsqrt.pop %v2508
        %v2671 = vmul.f32 %v2508, %v2670
        %vm2672 = vcmp.eq.f32.partialorder %v2508, inf
        %v2673 = vsel %vm2672, %v2508, %v2671
        %vm2674 = vcmp.eq.f32.partialorder %v2508, 0.0
        %v2675 = vand.u32 %v2508, 2147483648
        %v2676 = vsel %vm2674, %v2675, %v2673
        %v2677 = vrsqrt.pop %v2515
        %v2678 = vmul.f32 %v2515, %v2677
        %vm2679 = vcmp.eq.f32.partialorder %v2515, inf
        %v2680 = vsel %vm2679, %v2515, %v2678
        %vm2681 = vcmp.eq.f32.partialorder %v2515, 0.0
        %v2682 = vand.u32 %v2515, 2147483648
        %v2683 = vsel %vm2681, %v2682, %v2680
        %v2684 = vrsqrt.pop %v2522
        %v2685 = vmul.f32 %v2522, %v2684
        %vm2686 = vcmp.eq.f32.partialorder %v2522, inf
        %v2687 = vsel %vm2686, %v2522, %v2685
        %vm2688 = vcmp.eq.f32.partialorder %v2522, 0.0
        %v2689 = vand.u32 %v2522, 2147483648
        %v2690 = vsel %vm2688, %v2689, %v2687
        %v2691 = vrsqrt.pop %v2529
        %v2692 = vmul.f32 %v2529, %v2691
        %vm2693 = vcmp.eq.f32.partialorder %v2529, inf
        %v2694 = vsel %vm2693, %v2529, %v2692
        %vm2695 = vcmp.eq.f32.partialorder %v2529, 0.0
        %v2696 = vand.u32 %v2529, 2147483648
        %v2697 = vsel %vm2695, %v2696, %v2694
        %v2698 = vrsqrt.pop %v2536
        %v2699 = vmul.f32 %v2536, %v2698
        %vm2700 = vcmp.eq.f32.partialorder %v2536, inf
        %v2701 = vsel %vm2700, %v2536, %v2699
        %vm2702 = vcmp.eq.f32.partialorder %v2536, 0.0
        %v2703 = vand.u32 %v2536, 2147483648
        %v2704 = vsel %vm2702, %v2703, %v2701
        %v2705 = vrsqrt.pop %v2543
        %v2706 = vmul.f32 %v2543, %v2705
        %vm2707 = vcmp.eq.f32.partialorder %v2543, inf
        %v2708 = vsel %vm2707, %v2543, %v2706
        %vm2709 = vcmp.eq.f32.partialorder %v2543, 0.0
        %v2710 = vand.u32 %v2543, 2147483648
        %v2711 = vsel %vm2709, %v2710, %v2708
        %v2712 = vrsqrt.pop %v2550
        %v2713 = vmul.f32 %v2550, %v2712
        %vm2714 = vcmp.eq.f32.partialorder %v2550, inf
        %v2715 = vsel %vm2714, %v2550, %v2713
        %vm2716 = vcmp.eq.f32.partialorder %v2550, 0.0
        %v2717 = vand.u32 %v2550, 2147483648
        %v2718 = vsel %vm2716, %v2717, %v2715
        %v2719 = vrsqrt.pop %v2557
        %v2720 = vmul.f32 %v2557, %v2719
        %vm2721 = vcmp.eq.f32.partialorder %v2557, inf
        %v2722 = vsel %vm2721, %v2557, %v2720
        %vm2723 = vcmp.eq.f32.partialorder %v2557, 0.0
        %v2724 = vand.u32 %v2557, 2147483648
        %v2725 = vsel %vm2723, %v2724, %v2722
        %v2726 = vrsqrt.pop %v2564
        %v2727 = vmul.f32 %v2564, %v2726
        %vm2728 = vcmp.eq.f32.partialorder %v2564, inf
        %v2729 = vsel %vm2728, %v2564, %v2727
        %vm2730 = vcmp.eq.f32.partialorder %v2564, 0.0
        %v2731 = vand.u32 %v2564, 2147483648
        %v2732 = vsel %vm2730, %v2731, %v2729
        %v2733 = vrsqrt.pop %v2571
        %v2734 = vmul.f32 %v2571, %v2733
        %vm2735 = vcmp.eq.f32.partialorder %v2571, inf
        %v2736 = vsel %vm2735, %v2571, %v2734
        %vm2737 = vcmp.eq.f32.partialorder %v2571, 0.0
        %v2738 = vand.u32 %v2571, 2147483648
        %v2739 = vsel %vm2737, %v2738, %v2736
        %v2740 = vrsqrt.pop %v2578
        %v2741 = vmul.f32 %v2578, %v2740
        %vm2742 = vcmp.eq.f32.partialorder %v2578, inf
        %v2743 = vsel %vm2742, %v2578, %v2741
        %vm2744 = vcmp.eq.f32.partialorder %v2578, 0.0
        %v2745 = vand.u32 %v2578, 2147483648
        %v2746 = vsel %vm2744, %v2745, %v2743
        %v2747 = vrsqrt.pop %v2585
        %v2748 = vmul.f32 %v2585, %v2747
        %vm2749 = vcmp.eq.f32.partialorder %v2585, inf
        %v2750 = vsel %vm2749, %v2585, %v2748
        %vm2751 = vcmp.eq.f32.partialorder %v2585, 0.0
        %v2752 = vand.u32 %v2585, 2147483648
        %v2753 = vsel %vm2751, %v2752, %v2750
        %v2754 = vrsqrt.pop %v2592
        %v2755 = vmul.f32 %v2592, %v2754
        %vm2756 = vcmp.eq.f32.partialorder %v2592, inf
        %v2757 = vsel %vm2756, %v2592, %v2755
        %vm2758 = vcmp.eq.f32.partialorder %v2592, 0.0
        %v2759 = vand.u32 %v2592, 2147483648
        %v2760 = vsel %vm2758, %v2759, %v2757
        %v2761 = vrsqrt.pop %v2599
        %v2762 = vmul.f32 %v2599, %v2761
        %vm2763 = vcmp.eq.f32.partialorder %v2599, inf
        %v2764 = vsel %vm2763, %v2599, %v2762
        %vm2765 = vcmp.eq.f32.partialorder %v2599, 0.0
        %v2766 = vand.u32 %v2599, 2147483648
        %v2767 = vsel %vm2765, %v2766, %v2764
        %v2768 = vrsqrt.pop %v2606
        %v2769 = vmul.f32 %v2606, %v2768
        %vm2770 = vcmp.eq.f32.partialorder %v2606, inf
        %v2771 = vsel %vm2770, %v2606, %v2769
        %vm2772 = vcmp.eq.f32.partialorder %v2606, 0.0
        %v2773 = vand.u32 %v2606, 2147483648
        %v2774 = vsel %vm2772, %v2773, %v2771
        %v2775 = vrsqrt.pop %v2613
        %v2776 = vmul.f32 %v2613, %v2775
        %vm2777 = vcmp.eq.f32.partialorder %v2613, inf
        %v2778 = vsel %vm2777, %v2613, %v2776
        %vm2779 = vcmp.eq.f32.partialorder %v2613, 0.0
        %v2780 = vand.u32 %v2613, 2147483648
        %v2781 = vsel %vm2779, %v2780, %v2778
        %v2782 = vrsqrt.pop %v2620
        %v2783 = vmul.f32 %v2620, %v2782
        %vm2784 = vcmp.eq.f32.partialorder %v2620, inf
        %v2785 = vsel %vm2784, %v2620, %v2783
        %vm2786 = vcmp.eq.f32.partialorder %v2620, 0.0
        %v2787 = vand.u32 %v2620, 2147483648
        %v2788 = vsel %vm2786, %v2787, %v2785
        %v2789 = vrsqrt.pop %v2627
        %v2790 = vmul.f32 %v2627, %v2789
        %vm2791 = vcmp.eq.f32.partialorder %v2627, inf
        %v2792 = vsel %vm2791, %v2627, %v2790
        %vm2793 = vcmp.eq.f32.partialorder %v2627, 0.0
        %v2794 = vand.u32 %v2627, 2147483648
        %v2795 = vsel %vm2793, %v2794, %v2792
        %v2796 = vrsqrt.pop %v2634
        %v2797 = vmul.f32 %v2634, %v2796
        %vm2798 = vcmp.eq.f32.partialorder %v2634, inf
        %v2799 = vsel %vm2798, %v2634, %v2797
        %vm2800 = vcmp.eq.f32.partialorder %v2634, 0.0
        %v2801 = vand.u32 %v2634, 2147483648
        %v2802 = vsel %vm2800, %v2801, %v2799
        %v2803 = vrsqrt.pop %v2641
        %v2804 = vmul.f32 %v2641, %v2803
        %vm2805 = vcmp.eq.f32.partialorder %v2641, inf
        %v2806 = vsel %vm2805, %v2641, %v2804
        %vm2807 = vcmp.eq.f32.partialorder %v2641, 0.0
        %v2808 = vand.u32 %v2641, 2147483648
        %v2809 = vsel %vm2807, %v2808, %v2806
        %v2810 = vrsqrt.pop %v2648
        %v2811 = vmul.f32 %v2648, %v2810
        %vm2812 = vcmp.eq.f32.partialorder %v2648, inf
        %v2813 = vsel %vm2812, %v2648, %v2811
        %vm2814 = vcmp.eq.f32.partialorder %v2648, 0.0
        %v2815 = vand.u32 %v2648, 2147483648
        %v2816 = vsel %vm2814, %v2815, %v2813
        %v2817 = vrsqrt.pop %v2655
        %v2818 = vmul.f32 %v2655, %v2817
        %vm2819 = vcmp.eq.f32.partialorder %v2655, inf
        %v2820 = vsel %vm2819, %v2655, %v2818
        %vm2821 = vcmp.eq.f32.partialorder %v2655, 0.0
        %v2822 = vand.u32 %v2655, 2147483648
        %v2823 = vsel %vm2821, %v2822, %v2820
        %v2824 = vrsqrt.pop %v2662
        %v2825 = vmul.f32 %v2662, %v2824
        %vm2826 = vcmp.eq.f32.partialorder %v2662, inf
        %v2827 = vsel %vm2826, %v2662, %v2825
        %vm2828 = vcmp.eq.f32.partialorder %v2662, 0.0
        %v2829 = vand.u32 %v2662, 2147483648
        %v2830 = vsel %vm2828, %v2829, %v2827
        %v2855 = vlaneseq
        %v2856 = vshrl.u32 %v2855, 7
        %v2857 = vsub.s32 %v1647, %v2856
        %v2858 = vrot.slane %v2669, %v2857
        %v2859 = vlaneseq
        %v2860 = vshrl.u32 %v2859, 7
        %v2861 = vsub.s32 %v1652, %v2860
        %v2862 = vrot.slane %v2676, %v2861
        %v2863 = vsel %vm1657, %v2862, %v2858
        %v2864 = vlaneseq
        %v2865 = vshrl.u32 %v2864, 7
        %v2866 = vsub.s32 %v1659, %v2865
        %v2867 = vrot.slane %v2683, %v2866
        %v2868 = vsel %vm1664, %v2867, %v2863
        %v2869 = vlaneseq
        %v2870 = vshrl.u32 %v2869, 7
        %v2871 = vsub.s32 %v1647, %v2870
        %v2872 = vrot.slane %v2690, %v2871
        %v2873 = vlaneseq
        %v2874 = vshrl.u32 %v2873, 7
        %v2875 = vsub.s32 %v1652, %v2874
        %v2876 = vrot.slane %v2697, %v2875
        %v2877 = vsel %vm1657, %v2876, %v2872
        %v2878 = vlaneseq
        %v2879 = vshrl.u32 %v2878, 7
        %v2880 = vsub.s32 %v1659, %v2879
        %v2881 = vrot.slane %v2704, %v2880
        %v2882 = vsel %vm1664, %v2881, %v2877
        %v2883 = vlaneseq
        %v2884 = vshrl.u32 %v2883, 7
        %v2885 = vsub.s32 %v1647, %v2884
        %v2886 = vrot.slane %v2711, %v2885
        %v2887 = vlaneseq
        %v2888 = vshrl.u32 %v2887, 7
        %v2889 = vsub.s32 %v1652, %v2888
        %v2890 = vrot.slane %v2718, %v2889
        %v2891 = vsel %vm1657, %v2890, %v2886
        %v2892 = vlaneseq
        %v2893 = vshrl.u32 %v2892, 7
        %v2894 = vsub.s32 %v1659, %v2893
        %v2895 = vrot.slane %v2725, %v2894
        %v2896 = vsel %vm1664, %v2895, %v2891
        %v2897 = vlaneseq
        %v2898 = vshrl.u32 %v2897, 7
        %v2899 = vsub.s32 %v1647, %v2898
        %v2900 = vrot.slane %v2732, %v2899
        %v2901 = vlaneseq
        %v2902 = vshrl.u32 %v2901, 7
        %v2903 = vsub.s32 %v1652, %v2902
        %v2904 = vrot.slane %v2739, %v2903
        %v2905 = vsel %vm1657, %v2904, %v2900
        %v2906 = vlaneseq
        %v2907 = vshrl.u32 %v2906, 7
        %v2908 = vsub.s32 %v1659, %v2907
        %v2909 = vrot.slane %v2746, %v2908
        %v2910 = vsel %vm1664, %v2909, %v2905
        %v2911 = vlaneseq
        %v2912 = vshrl.u32 %v2911, 7
        %v2913 = vsub.s32 %v1647, %v2912
        %v2914 = vrot.slane %v2753, %v2913
        %v2915 = vlaneseq
        %v2916 = vshrl.u32 %v2915, 7
        %v2917 = vsub.s32 %v1652, %v2916
        %v2918 = vrot.slane %v2760, %v2917
        %v2919 = vsel %vm1657, %v2918, %v2914
        %v2920 = vlaneseq
        %v2921 = vshrl.u32 %v2920, 7
        %v2922 = vsub.s32 %v1659, %v2921
        %v2923 = vrot.slane %v2767, %v2922
        %v2924 = vsel %vm1664, %v2923, %v2919
        %v2925 = vlaneseq
        %v2926 = vshrl.u32 %v2925, 7
        %v2927 = vsub.s32 %v1647, %v2926
        %v2928 = vrot.slane %v2774, %v2927
        %v2929 = vlaneseq
        %v2930 = vshrl.u32 %v2929, 7
        %v2931 = vsub.s32 %v1652, %v2930
        %v2932 = vrot.slane %v2781, %v2931
        %v2933 = vsel %vm1657, %v2932, %v2928
        %v2934 = vlaneseq
        %v2935 = vshrl.u32 %v2934, 7
        %v2936 = vsub.s32 %v1659, %v2935
        %v2937 = vrot.slane %v2788, %v2936
        %v2938 = vsel %vm1664, %v2937, %v2933
        %v2939 = vlaneseq
        %v2940 = vshrl.u32 %v2939, 7
        %v2941 = vsub.s32 %v1647, %v2940
        %v2942 = vrot.slane %v2795, %v2941
        %v2943 = vlaneseq
        %v2944 = vshrl.u32 %v2943, 7
        %v2945 = vsub.s32 %v1652, %v2944
        %v2946 = vrot.slane %v2802, %v2945
        %v2947 = vsel %vm1657, %v2946, %v2942
        %v2948 = vlaneseq
        %v2949 = vshrl.u32 %v2948, 7
        %v2950 = vsub.s32 %v1659, %v2949
        %v2951 = vrot.slane %v2809, %v2950
        %v2952 = vsel %vm1664, %v2951, %v2947
        %v2953 = vlaneseq
        %v2954 = vshrl.u32 %v2953, 7
        %v2955 = vsub.s32 %v1647, %v2954
        %v2956 = vrot.slane %v2816, %v2955
        %v2957 = vlaneseq
        %v2958 = vshrl.u32 %v2957, 7
        %v2959 = vsub.s32 %v1652, %v2958
        %v2960 = vrot.slane %v2823, %v2959
        %v2961 = vsel %vm1657, %v2960, %v2956
        %v2962 = vlaneseq
        %v2963 = vshrl.u32 %v2962, 7
        %v2964 = vsub.s32 %v1659, %v2963
        %v2965 = vrot.slane %v2830, %v2964
        %v2966 = vsel %vm1664, %v2965, %v2961
        %v2967 = vsel %vm1764, %v2882, %v2868
        %v2968 = vsel %vm1766, %v2896, %v2967
        %v2969 = vsel %vm1768, %v2910, %v2968
        %v2970 = vsel %vm1770, %v2924, %v2969
        %v2971 = vsel %vm1772, %v2938, %v2970
        %v2972 = vsel %vm1774, %v2952, %v2971
        %v2973 = vsel %vm1776, %v2966, %v2972
        %s2975 = scalar_lea.vmem %s270, 16 [#allocation2]
        %2976 = vst.msk [vmem:[%s2975] sm:$0xff] %vm1779, %v2973
        %s2977 = sand.u32 %s169, 1
        %s2978 = scalar_lea.sflag [#allocation3], %s2977
        %s2979 = sand.u32 %s169, 1
        %s2980 = smul.addr %s2979, 24
        %s2981 = scalar_lea.vmem [#allocation2], %s2980
        // Predicated region
        $region45: #{tpu_custom_call.1} parent=43 // pred_check
          %p2982 = pneg %p179
        $region46: #{tpu_custom_call.1} parent=43 // pred_check_branch
          %2984 = sbr.rel (%p2982) target = $region48
        $region47: #{tpu_custom_call.1} parent=43 // pred_region
          %s2986 = ssub.s32 384, 384
          %2987 = vsyncadd %s2978, %s2986
          %s2988 = smul.addr %s20, 128
          %s2989 = scalar_lea.hbm %s6, %s2988
          %s2990 = sshll.u32 %s2981, 4
          %s2991 = int_to_ptr.vmem [resolvable:$true] %s2990
          %2996 = dma.vmem_to_hbm [thread:$0]  %s2991, 384, %s2989, %s2978, 128, 256, 8
        $region48: #{tpu_custom_call.1} parent=43 // pred_fallthru
          _
      $region44: #{tpu_custom_call.1} parent=5 // pred_fallthru
        _
      %p2997 = scmp.le.s32.totalorder 2, %s15
      // Predicated region
      $region49: #{tpu_custom_call.1} parent=5 // pred_check
        %p2998 = pneg %p2997
      $region50: #{tpu_custom_call.1} parent=5 // pred_check_branch
        %3000 = sbr.rel (%p2998) target = $region52
      $region51: #{tpu_custom_call.1} parent=5 // pred_region
        %s3001 = ssub.s32 %s15, 2
        // Predicated region
        $region53: #{tpu_custom_call.1} parent=51 // pred_check
          %p3002 = pneg %p185
        $region54: #{tpu_custom_call.1} parent=51 // pred_check_branch
          %3004 = sbr.rel (%p3002) target = $region56
        $region55: #{tpu_custom_call.1} parent=51 // pred_region
          %s3005 = sand.u32 %s170, 1
          %s3006 = scalar_lea.sflag [#allocation3], %s3005
          %s3007 = sand.u32 %s170, 1
          %s3008 = smul.addr %s3007, 24
          %s3009 = scalar_lea.vmem [#allocation2], %s3008
          %3010 = dma.done %s3006, 384
        $region56: #{tpu_custom_call.1} parent=51 // pred_fallthru
          _
      $region52: #{tpu_custom_call.1} parent=5 // pred_fallthru
        _
    $region6: #{tpu_custom_call.1} parent=1 // loop_footer
      %s19 = sadd.s32 1, %s15
    $region7: #{tpu_custom_call.1} parent=1 // loop_footer_branch
      %14 = sbr.rel target = $region3
    $region8: #{tpu_custom_call.1} parent=1 // loop_exit
      _
    %3011 = vsyncpa [#allocation3], 1
    %s3012 = scalar_lea.sflag [#allocation3], 1
    %3013 = vsyncpa %s3012, 1

</llo_original>
